<compile_context>
chip_gen: v6e
topology: v6e:2x2x1
jax: 0.10.0
libtpu: 0.0.40
codegen_flags: <defaults>
</compile_context>

<pallas_src>
import functools
import math

import jax
import jax.numpy as jnp
from jax.experimental import pallas as pl
from jax.experimental.pallas import tpu as pltpu

# ----------------------------------------------------------------------------
# Small (but fully representative) hyper-parameters for SegFormer3D.__init__
# ----------------------------------------------------------------------------
CHANNELS     = 4
NUM_CLASSES  = 3
DEPTHS       = (1, 1)
KERNELS      = (3, 3)
STRIDES      = (2, 2)
HEAD_DIM     = 8
HEADS        = (1, 2)
EMHA_TILES   = (2, 1)          # stage 1 exercises the conv reducer, stage 2 is Identity
FF_RATIOS    = (2, 2)
DECODER_DIM  = 16
SCALE_FACTOR = 1
DIMS = tuple(HEAD_DIM * h for h in HEADS)             # (8, 16)

# torch.as_tensor([1, *strides[1:]]).cumprod(0) * scale_factor
_cum = [1]
for _s in STRIDES[1:]:
    _cum.append(_cum[-1] * _s)
SCALE_FACTORS = tuple(int(v * SCALE_FACTOR) for v in _cum)   # (1, 2)

LN_EPS = 1e-5
BN_EPS = 1e-5

STAGE_CFG = []
for _dim, _k, _s, _h, _t, _r, _d in zip(DIMS, KERNELS, STRIDES, HEADS,
                                        EMHA_TILES, FF_RATIOS, DEPTHS):
    _pad = _k // 2 if _k % 2 else (_k - _s) // 2
    STAGE_CFG.append(dict(dim=_dim, kernel=_k, stride=_s, pad=_pad,
                          heads=_h, tile=_t, ff_ratio=_r, depth=_d))

# Row-tile sizes (multiples of 8; chosen to stay far below the 16 MiB scoped
# VMEM default on v5e even with double buffering, while being large enough to
# sit near the HBM roofline on v6e/v7x).
MM_TILE_ROWS   = 512
LN_TILE_ROWS   = 1024
ATTN_TILE_Q    = 256
ATTN_TILE_K    = 512


# ----------------------------------------------------------------------------
# Fused (LN -> matmul -> bias/LN/residual/LN) kernel, row-tiled.
# ----------------------------------------------------------------------------
def _fused_mm_kernel(*refs, has_bias, has_pre_ln, has_post_ln, has_res,
                     has_final_ln, eps):
    it = iter(refs)
    x_ref = next(it)
    w_ref = next(it)
    b_ref  = next(it) if has_bias else None
    pg_ref = next(it) if has_pre_ln else None
    pb_ref = next(it) if has_pre_ln else None
    qg_ref = next(it) if has_post_ln else None
    qb_ref = next(it) if has_post_ln else None
    r_ref  = next(it) if has_res else None
    fg_ref = next(it) if has_final_ln else None
    fb_ref = next(it) if has_final_ln else None
    o_ref = next(it)

    def _ln(v, g_ref, b_ref_):
        mu = jnp.mean(v, axis=-1, keepdims=True)
        vc = v - mu
        var = jnp.mean(vc * vc, axis=-1, keepdims=True)
        return (vc * jax.lax.rsqrt(var + eps)) * g_ref[...] + b_ref_[...]

    x = x_ref[...]
    if has_pre_ln:                                   # LayerNorm prologue (f32)
        x = _ln(x, pg_ref, pb_ref)
    # bf16 MXU matmul with f32 accumulation.
    y = jnp.dot(x.astype(jnp.bfloat16), w_ref[...].astype(jnp.bfloat16),
                preferred_element_type=jnp.float32)
    if has_bias:
        y = y + b_ref[...]
    if has_post_ln:                                  # LayerNorm epilogue (f32)
        y = _ln(y, qg_ref, qb_ref)
    if has_res:                                      # fused residual add
        y = y + r_ref[...]
    if has_final_ln:                                 # post-residual LayerNorm
        y = _ln(y, fg_ref, fb_ref)
    o_ref[...] = y


def fused_matmul(x, w, *, bias=None, pre_ln=None, post_ln=None, residual=None,
                 final_ln=None, tile_rows=MM_TILE_ROWS):
    """y = [LN]([LN](x) @ w [+ bias] [LN] [+ residual]).  x: (N,K), w: (K,M)."""
    N, K = x.shape
    M = w.shape[1]
    tm = N if N <= tile_rows else tile_rows
    in_specs = [pl.BlockSpec((tm, K), lambda i: (i, 0)),
                pl.BlockSpec((K, M), lambda i: (0, 0))]
    args = [x, w]
    if bias is not None:
        in_specs.append(pl.BlockSpec((1, M), lambda i: (0, 0)))
        args.append(bias.reshape(1, M))
    if pre_ln is not None:
        g, b = pre_ln
        in_specs += [pl.BlockSpec((1, K), lambda i: (0, 0)),
                     pl.BlockSpec((1, K), lambda i: (0, 0))]
        args += [g.reshape(1, K), b.reshape(1, K)]
    if post_ln is not None:
        g, b = post_ln
        in_specs += [pl.BlockSpec((1, M), lambda i: (0, 0)),
                     pl.BlockSpec((1, M), lambda i: (0, 0))]
        args += [g.reshape(1, M), b.reshape(1, M)]
    if residual is not None:
        in_specs.append(pl.BlockSpec((tm, M), lambda i: (i, 0)))
        args.append(residual)
    if final_ln is not None:
        g, b = final_ln
        in_specs += [pl.BlockSpec((1, M), lambda i: (0, 0)),
                     pl.BlockSpec((1, M), lambda i: (0, 0))]
        args += [g.reshape(1, M), b.reshape(1, M)]

    kernel = functools.partial(_fused_mm_kernel,
                               has_bias=bias is not None,
                               has_pre_ln=pre_ln is not None,
                               has_post_ln=post_ln is not None,
                               has_res=residual is not None,
                               has_final_ln=final_ln is not None,
                               eps=LN_EPS)
    return pl.pallas_call(
        kernel,
        out_shape=jax.ShapeDtypeStruct((N, M), jnp.float32),
        grid=(pl.cdiv(N, tm),),
        in_specs=in_specs,
        out_specs=pl.BlockSpec((tm, M), lambda i: (i, 0)),
        compiler_params=pltpu.CompilerParams(dimension_semantics=("parallel",)),
    )(*args)


# ----------------------------------------------------------------------------
# Stand-alone row-tiled LayerNorm (only where the output has >1 consumer).
# ----------------------------------------------------------------------------
def _layernorm_kernel(x_ref, g_ref, b_ref, o_ref, *, eps):
    x = x_ref[...]
    mu = jnp.mean(x, axis=-1, keepdims=True)
    xc = x - mu
    var = jnp.mean(xc * xc, axis=-1, keepdims=True)
    o_ref[...] = (xc * jax.lax.rsqrt(var + eps)) * g_ref[...] + b_ref[...]


def pallas_layernorm_tokens(x2d, gamma, beta, eps=LN_EPS, tile_rows=LN_TILE_ROWS):
    N, C = x2d.shape
    tm = N if N <= tile_rows else tile_rows
    return pl.pallas_call(
        functools.partial(_layernorm_kernel, eps=eps),
        out_shape=jax.ShapeDtypeStruct((N, C), jnp.float32),
        grid=(pl.cdiv(N, tm),),
        in_specs=[pl.BlockSpec((tm, C), lambda i: (i, 0)),
                  pl.BlockSpec((1, C), lambda i: (0, 0)),
                  pl.BlockSpec((1, C), lambda i: (0, 0))],
        out_specs=pl.BlockSpec((tm, C), lambda i: (i, 0)),
        compiler_params=pltpu.CompilerParams(dimension_semantics=("parallel",)),
    )(x2d, gamma.reshape(1, C), beta.reshape(1, C))


# ----------------------------------------------------------------------------
# Attention.
#   * Fast path: whole K/V fits one tile -> plain softmax, no scratch, both
#     grid axes parallel.
#   * General path: flash-style online softmax with m/l/acc VMEM scratch and
#     an "arbitrary" Lk axis.  No in-kernel k.T in either path.
# ----------------------------------------------------------------------------
def _attn_single_tile_kernel(q_ref, k_ref, v_ref, o_ref, *, scale):
    q = q_ref[0].astype(jnp.bfloat16)
    k = k_ref[0].astype(jnp.bfloat16)
    v = v_ref[0].astype(jnp.bfloat16)
    # Contract last-vs-last directly (no transpose of K).
    s = jax.lax.dot_general(q, k, (((1,), (1,)), ((), ())),
                            preferred_element_type=jnp.float32) * scale
    m = jnp.max(s, axis=-1, keepdims=True)
    p = jnp.exp(s - m)
    l = jnp.sum(p, axis=-1, keepdims=True)
    o = jax.lax.dot_general(p.astype(jnp.bfloat16), v, (((1,), (0,)), ((), ())),
                            preferred_element_type=jnp.float32)
    o_ref[0] = o * pl.reciprocal(l, approx=True)


def _flash_kernel(q_ref, k_ref, v_ref, o_ref, m_sc, l_sc, acc_sc,
                  *, scale, lk_total, tk):
    ki = pl.program_id(2)

    @pl.when(ki == 0)
    def _():
        m_sc[...] = jnp.full_like(m_sc, -jnp.inf)
        l_sc[...] = jnp.zeros_like(l_sc)
        acc_sc[...] = jnp.zeros_like(acc_sc)

    q = q_ref[0].astype(jnp.bfloat16)
    k = k_ref[0].astype(jnp.bfloat16)
    v = v_ref[0].astype(jnp.bfloat16)
    s = jax.lax.dot_general(q, k, (((1,), (1,)), ((), ())),
                            preferred_element_type=jnp.float32) * scale
    if lk_total % tk != 0:   # mask out-of-range key columns of the partial tile
        kidx = ki * tk + jax.lax.broadcasted_iota(jnp.int32, s.shape, 1)
        s = jnp.where(kidx < lk_total, s, -jnp.inf)

    m_prev = m_sc[...]
    m_new = jnp.maximum(m_prev, jnp.max(s, axis=-1, keepdims=True))
    alpha = jnp.exp(m_prev - m_new)
    p = jnp.exp(s - m_new)
    l_sc[...] = alpha * l_sc[...] + jnp.sum(p, axis=-1, keepdims=True)
    acc_sc[...] = alpha * acc_sc[...] + jax.lax.dot_general(
        p.astype(jnp.bfloat16), v, (((1,), (0,)), ((), ())),
        preferred_element_type=jnp.float32)
    m_sc[...] = m_new

    @pl.when(ki == pl.num_programs(2) - 1)
    def _():
        o_ref[0] = acc_sc[...] * pl.reciprocal(l_sc[...], approx=True)


def pallas_attention(q, k, v, scale, tq=ATTN_TILE_Q, tk=ATTN_TILE_K):
    """q: (BH, Lq, Dh), k/v: (BH, Lk, Dh) -> (BH, Lq, Dh)."""
    BH, Lq, Dh = q.shape
    Lk = k.shape[1]
    tq_ = Lq if Lq <= tq else tq

    if Lk <= tk:
        # Single-tile K/V: plain softmax, no scratch, both axes parallel.
        return pl.pallas_call(
            functools.partial(_attn_single_tile_kernel, scale=scale),
            out_shape=jax.ShapeDtypeStruct((BH, Lq, Dh), jnp.float32),
            grid=(BH, pl.cdiv(Lq, tq_)),
            in_specs=[pl.BlockSpec((1, tq_, Dh), lambda b, qi: (b, qi, 0)),
                      pl.BlockSpec((1, Lk, Dh), lambda b, qi: (b, 0, 0)),
                      pl.BlockSpec((1, Lk, Dh), lambda b, qi: (b, 0, 0))],
            out_specs=pl.BlockSpec((1, tq_, Dh), lambda b, qi: (b, qi, 0)),
            compiler_params=pltpu.CompilerParams(
                dimension_semantics=("parallel", "parallel")),
        )(q, k, v)

    tk_ = tk
    grid = (BH, pl.cdiv(Lq, tq_), pl.cdiv(Lk, tk_))
    return pl.pallas_call(
        functools.partial(_flash_kernel, scale=scale, lk_total=Lk, tk=tk_),
        out_shape=jax.ShapeDtypeStruct((BH, Lq, Dh), jnp.float32),
        grid=grid,
        in_specs=[pl.BlockSpec((1, tq_, Dh), lambda b, qi, ki: (b, qi, 0)),
                  pl.BlockSpec((1, tk_, Dh), lambda b, qi, ki: (b, ki, 0)),
                  pl.BlockSpec((1, tk_, Dh), lambda b, qi, ki: (b, ki, 0))],
        out_specs=pl.BlockSpec((1, tq_, Dh), lambda b, qi, ki: (b, qi, 0)),
        scratch_shapes=[pltpu.VMEM((tq_, 1), jnp.float32),
                        pltpu.VMEM((tq_, 1), jnp.float32),
                        pltpu.VMEM((tq_, Dh), jnp.float32)],
        compiler_params=pltpu.CompilerParams(
            dimension_semantics=("parallel", "parallel", "arbitrary")),
    )(q, k, v)


# ----------------------------------------------------------------------------
# Depthwise 3x3x3 conv + exact-erf GELU.  Padding lives in a VMEM scratch
# (no HBM-side jnp.pad) and the grid is parallel over the batch axis.
# ----------------------------------------------------------------------------
def _dwconv3_gelu_kernel(x_ref, w_ref, b_ref, o_ref, xp_ref):
    _, D, H, W, C = x_ref.shape
    xp_ref[...] = jnp.zeros_like(xp_ref)
    xp_ref[1:D + 1, 1:H + 1, 1:W + 1, :] = x_ref[0]
    xp = xp_ref[...]
    w = w_ref[...]
    acc = jnp.zeros((D, H, W, C), jnp.float32)
    for kd in range(3):
        for kh in range(3):
            for kw in range(3):
                acc = acc + (xp[kd:kd + D, kh:kh + H, kw:kw + W, :]
                             * w[kd:kd + 1, kh:kh + 1, kw:kw + 1, :])
    acc = acc + b_ref[...]
    # exact GELU, matching torch.nn.GELU() default (erf variant)
    o_ref[0] = acc * 0.5 * (1.0 + jax.lax.erf(acc * 0.7071067811865476))


def pallas_dwconv3_gelu(x_cl, w, b):
    # TODO(synk): for very large D/H/W also tile the depth axis with a manual
    # halo DMA (memory_space=pl.ANY + make_async_copy); batch tiling suffices here.
    B, D, H, W, C = x_cl.shape
    return pl.pallas_call(
        _dwconv3_gelu_kernel,
        out_shape=jax.ShapeDtypeStruct((B, D, H, W, C), jnp.float32),
        grid=(B,),
        in_specs=[pl.BlockSpec((1, D, H, W, C), lambda bi: (bi, 0, 0, 0, 0)),
                  pl.BlockSpec((3, 3, 3, C), lambda bi: (0, 0, 0, 0)),
                  pl.BlockSpec((1, 1, 1, C), lambda bi: (0, 0, 0, 0))],
        out_specs=pl.BlockSpec((1, D, H, W, C), lambda bi: (bi, 0, 0, 0, 0)),
        scratch_shapes=[pltpu.VMEM((D + 2, H + 2, W + 2, C), jnp.float32)],
        compiler_params=pltpu.CompilerParams(dimension_semantics=("parallel",)),
    )(x_cl, w, b.reshape(1, 1, 1, C))


# ----------------------------------------------------------------------------
# Fused decoder head: feature product * BN(scale/shift) -> ReLU -> 1x1 conv.
# ----------------------------------------------------------------------------
def _head_kernel(n_feats, *refs):
    feat_refs = refs[:n_feats]
    s_ref, t_ref, w_ref, b_ref, o_ref = refs[n_feats:]
    # torch.einsum('bcdhw,bcdhw,... -> bcdhw', ...) == elementwise product
    y = feat_refs[0][...]
    for r in feat_refs[1:]:
        y = y * r[...]
    y = y * s_ref[...] + t_ref[...]     # eval-mode BatchNorm3d folded to scale/shift
    y = jnp.maximum(y, 0.0)             # ReLU (Dropout(p=0) is identity)
    # TODO(synk): NUM_CLASSES=3 output is lane-sparse; a transposed (classes,
    # tokens) emission would make the final store lane-dense.
    o_ref[...] = (jnp.dot(y.astype(jnp.bfloat16), w_ref[...].astype(jnp.bfloat16),
                          preferred_element_type=jnp.float32) + b_ref[...])


def pallas_head(feats2d, bn_scale, bn_shift, w, b, tile_rows=LN_TILE_ROWS):
    N, C = feats2d[0].shape
    M = w.shape[1]
    tm = N if N <= tile_rows else tile_rows
    n_f = len(feats2d)
    in_specs = ([pl.BlockSpec((tm, C), lambda i: (i, 0))] * n_f
                + [pl.BlockSpec((1, C), lambda i: (0, 0)),
                   pl.BlockSpec((1, C), lambda i: (0, 0)),
                   pl.BlockSpec((C, M), lambda i: (0, 0)),
                   pl.BlockSpec((1, M), lambda i: (0, 0))])
    return pl.pallas_call(
        functools.partial(_head_kernel, n_f),
        out_shape=jax.ShapeDtypeStruct((N, M), jnp.float32),
        grid=(pl.cdiv(N, tm),),
        in_specs=in_specs,
        out_specs=pl.BlockSpec((tm, M), lambda i: (i, 0)),
        compiler_params=pltpu.CompilerParams(dimension_semantics=("parallel",)),
    )(*feats2d, bn_scale.reshape(1, C), bn_shift.reshape(1, C), w, b.reshape(1, M))


# ----------------------------------------------------------------------------
# JAX glue (patch extraction, interpolation)
# ----------------------------------------------------------------------------
def conv3d_im2col(x_cl, w_flat, bias, kernel, stride, padding, post_ln=None):
    """Dense Conv3d via im2col (JAX glue) + fused Pallas matmul (+LN epilogue).

    x_cl: (B, D, H, W, Cin) channels-last.  w_flat: (k^3*Cin, Cout), rows
    ordered (kd, kh, kw, cin)."""
    # TODO(synk): im2col patch extraction stays in XLA; fusing it into the
    # matmul needs manual halo DMA (memory_space=pl.ANY + make_async_copy).
    B, D, H, W, C = x_cl.shape
    k, s, p = kernel, stride, padding
    Do = (D + 2 * p - k) // s + 1
    Ho = (H + 2 * p - k) // s + 1
    Wo = (W + 2 * p - k) // s + 1
    xp = jnp.pad(x_cl, ((0, 0), (p, p), (p, p), (p, p), (0, 0)))
    slices = []
    for kd in range(k):
        for kh in range(k):
            for kw in range(k):
                slices.append(xp[:, kd:kd + s * (Do - 1) + 1:s,
                                    kh:kh + s * (Ho - 1) + 1:s,
                                    kw:kw + s * (Wo - 1) + 1:s, :])
    patches = jnp.stack(slices, axis=4)                       # (B,Do,Ho,Wo,k^3,C)
    patches = patches.reshape(B * Do * Ho * Wo, k * k * k * C)
    y = fused_matmul(patches, w_flat, bias=bias, post_ln=post_ln)
    return y.reshape(B, Do, Ho, Wo, w_flat.shape[1])


def upsample_trilinear(x_cl, scale):
    """nn.Upsample(scale_factor=scale, mode='trilinear', align_corners=False)."""
    # TODO(synk): trilinear interpolation gather stays in plain JAX (no clean Pallas gather).
    if scale == 1:
        return x_cl

    def interp(x, axis):
        n_in = x.shape[axis]
        n_out = n_in * scale
        dst = jnp.arange(n_out, dtype=jnp.float32)
        src = jnp.maximum((dst + 0.5) / scale - 0.5, 0.0)
        lo = jnp.minimum(jnp.floor(src).astype(jnp.int32), n_in - 1)
        hi = jnp.minimum(lo + 1, n_in - 1)
        w = src - lo.astype(jnp.float32)
        shp = [1] * x.ndim
        shp[axis] = n_out
        w = w.reshape(shp)
        return jnp.take(x, lo, axis=axis) * (1.0 - w) + jnp.take(x, hi, axis=axis) * w

    for ax in (1, 2, 3):
        x_cl = interp(x_cl, ax)
    return x_cl


# ----------------------------------------------------------------------------
# Forward pass
# ----------------------------------------------------------------------------
def emhsa_block(x_cl, blk, heads, tile):
    """x + EMHSA(LayerNorm3d(x)) on a channels-last feature map."""
    B, D, H, W, C = x_cl.shape
    Lq = D * H * W
    x_tok = x_cl.reshape(B * Lq, C)
    p = blk['attn']
    Dh = C // heads
    # NOTE: weights are stored pre-transposed vs. PyTorch (x @ W, not x @ W.T).
    if tile > 1:
        # ln_x feeds both the q-projection and the sequence reducer, so compute
        # it once; the reducer conv gets its LayerNorm fused as an epilogue.
        ln_x = pallas_layernorm_tokens(x_tok, *blk['ln1']).reshape(B, D, H, W, C)
        r = conv3d_im2col(ln_x, p['red_w'], p['red_b'], tile, tile, 0,
                          post_ln=p['red_ln'])
        Lk = r.shape[1] * r.shape[2] * r.shape[3]
        q = fused_matmul(ln_x.reshape(B * Lq, C), p['in_w'][:, :C], bias=p['in_b'][:C])
        kv = fused_matmul(r.reshape(B * Lk, C), p['in_w'][:, C:], bias=p['in_b'][C:])
        k, v = kv[:, :C], kv[:, C:]
    else:
        # Single fused LayerNorm -> (C, 3C) QKV projection.
        Lk = Lq
        qkv = fused_matmul(x_tok, p['in_w'], bias=p['in_b'], pre_ln=blk['ln1'])
        q, k, v = qkv[:, :C], qkv[:, C:2 * C], qkv[:, 2 * C:]

    q = q.reshape(B, Lq, heads, Dh).transpose(0, 2, 1, 3).reshape(B * heads, Lq, Dh)
    k = k.reshape(B, Lk, heads, Dh).transpose(0, 2, 1, 3).reshape(B * heads, Lk, Dh)
    v = v.reshape(B, Lk, heads, Dh).transpose(0, 2, 1, 3).reshape(B * heads, Lk, Dh)
    o = pallas_attention(q, k, v, 1.0 / math.sqrt(Dh))
    o = o.reshape(B, heads, Lq, Dh).transpose(0, 2, 1, 3).reshape(B * Lq, C)
    # out-projection fused with bias and the residual add.
    y = fused_matmul(o, p['out_w'], bias=p['out_b'], residual=x_tok)
    return y.reshape(B, D, H, W, C)


def mix_ff_block(x_cl, blk, final_ln=None):
    """x + mix_feedforward(LayerNorm3d(x)) [, then the stage-final LayerNorm]."""
    B, D, H, W, C = x_cl.shape
    x_tok = x_cl.reshape(-1, C)
    p = blk['ff']
    hdim = p['w1'].shape[1]
    # TODO(synk): the w1 -> dwconv -> w2 chain could be fused into one kernel
    # per spatial tile to keep the expanded activation in VMEM (needs either
    # in-kernel reshape support at non-(8,128) shapes or per-row matmuls).
    h = fused_matmul(x_tok, p['w1'], pre_ln=blk['ln2'])          # LN2 + 1x1 conv (no bias)
    h = pallas_dwconv3_gelu(h.reshape(B, D, H, W, hdim), p['dw_w'], p['dw_b'])
    y = fused_matmul(h.reshape(-1, hdim), p['w2'], bias=p['b2'], residual=x_tok,
                     final_ln=final_ln)
    return y.reshape(B, D, H, W, C)


def segformer3d_forward(x_ncdhw, params):
    x = jnp.transpose(x_ncdhw, (0, 2, 3, 4, 1)).astype(jnp.float32)   # -> channels-last
    feats = []
    for cfg, sp in zip(STAGE_CFG, params['stages']):
        # patch-embedding conv (bias=False) with its LayerNorm fused as epilogue
        x = conv3d_im2col(x, sp['patch_w'], None, cfg['kernel'], cfg['stride'],
                          cfg['pad'], post_ln=sp['ln0'])
        n_blocks = len(sp['blocks'])
        for bi, blk in enumerate(sp['blocks']):
            x = emhsa_block(x, blk, cfg['heads'], cfg['tile'])
            # The stage-final LayerNorm3d is fused (post-residual) into the
            # last block's w2 matmul.
            is_last = bi == n_blocks - 1
            x = mix_ff_block(x, blk, final_ln=sp['ln_out'] if is_last else None)
        if n_blocks == 0:   # defensive: empty stage still applies ln_out
            B, D, H, W, C = x.shape
            x = pallas_layernorm_tokens(x.reshape(-1, C), *sp['ln_out']).reshape(
                B, D, H, W, C)
        feats.append(x)

    hp = params['head']
    ys = []
    for f, up, sf in zip(feats, hp['ups'], SCALE_FACTORS):
        B, D, H, W, C = f.shape
        y = fused_matmul(f.reshape(-1, C), up['w']).reshape(B, D, H, W, DECODER_DIM)
        ys.append(upsample_trilinear(y, sf))

    B, D, H, W, _ = ys[0].shape
    bn_scale = hp['bn_gamma'] * jax.lax.rsqrt(hp['bn_var'] + BN_EPS)
    bn_shift = hp['bn_beta'] - hp['bn_mean'] * bn_scale
    out = pallas_head([y.reshape(-1, DECODER_DIM) for y in ys],
                      bn_scale, bn_shift, hp['out_w'], hp['out_b'])
    out = out.reshape(B, D, H, W, NUM_CLASSES)
    return jnp.transpose(out, (0, 4, 1, 2, 3))                        # -> NCDHW


# ----------------------------------------------------------------------------
# Deterministic parameter construction (synthetic weights)
# ----------------------------------------------------------------------------
def make_params(key):
    keys = iter(jax.random.split(key, 512))

    def nrm(shape, scale=0.1):
        return scale * jax.random.normal(next(keys), shape, dtype=jnp.float32)

    def ln(dim):
        return (jnp.ones((dim,), jnp.float32), jnp.zeros((dim,), jnp.float32))

    stages = []
    dim_in = CHANNELS
    for cfg in STAGE_CFG:
        dim, k, t = cfg['dim'], cfg['kernel'], cfg['tile']
        hdim = dim * cfg['ff_ratio']
        sp = dict(patch_w=nrm((k * k * k * dim_in, dim)),
                  ln0=ln(dim), ln_out=ln(dim), blocks=[])
        for _ in range(cfg['depth']):
            attn = dict(in_w=nrm((dim, 3 * dim)), in_b=nrm((3 * dim,)),
                        out_w=nrm((dim, dim)), out_b=nrm((dim,)))
            if t > 1:
                attn['red_w'] = nrm((t * t * t * dim, dim))
                attn['red_b'] = nrm((dim,))
                attn['red_ln'] = ln(dim)
            sp['blocks'].append(dict(
                ln1=ln(dim), ln2=ln(dim), attn=attn,
                ff=dict(w1=nrm((dim, hdim)),
                        dw_w=nrm((3, 3, 3, hdim)), dw_b=nrm((hdim,)),
                        w2=nrm((hdim, dim)), b2=nrm((dim,)))))
        stages.append(sp)
        dim_in = dim

    head = dict(
        ups=[dict(w=nrm((d, DECODER_DIM))) for d in DIMS],
        bn_gamma=jnp.ones((DECODER_DIM,), jnp.float32),
        bn_beta=jnp.zeros((DECODER_DIM,), jnp.float32),
        bn_mean=jnp.zeros((DECODER_DIM,), jnp.float32),
        bn_var=jnp.ones((DECODER_DIM,), jnp.float32),
        out_w=nrm((DECODER_DIM, NUM_CLASSES)),
        out_b=nrm((NUM_CLASSES,)))
    return dict(stages=stages, head=head)


if __name__ == "__main__":
    key = jax.random.PRNGKey(0)
    x = jax.random.normal(key, (2, CHANNELS, 16, 16, 16), dtype=jnp.float32)   # NCDHW
    params = make_params(jax.random.fold_in(key, 1))
    out = segformer3d_forward(x, params)
    out = jax.block_until_ready(out)
    assert out.shape == (2, NUM_CLASSES, 8, 8, 8), out.shape
    assert bool(jnp.all(jnp.isfinite(out)))
    print("KERNEL_OK")
</pallas_src>

<mosaic_0001>
module attributes {stable_mosaic.version = 11 : i64} {
  func.func @_fused_mm_kernel(%arg0: i32, %arg1: memref<512x108xf32, #tpu.memory_space<vmem>>, %arg2: memref<108x8xf32, #tpu.memory_space<vmem>>, %arg3: memref<1x8xf32, #tpu.memory_space<vmem>>, %arg4: memref<1x8xf32, #tpu.memory_space<vmem>>, %arg5: memref<512x8xf32, #tpu.memory_space<vmem>>) attributes {dimension_semantics = [#tpu.dimension_semantics<parallel>], iteration_bounds = array<i64: 2>, scalar_prefetch = 0 : i64, scratch_operands = 0 : i64, tpu.core_type = #tpu.core_type<tc>, window_params = [{transform_indices = @transform_0, window_bounds = array<i64: 512, 108>}, {pipeline_mode = #tpu.pipeline_mode<synchronous>, transform_indices = @transform_1, window_bounds = array<i64: 108, 8>}, {pipeline_mode = #tpu.pipeline_mode<synchronous>, transform_indices = @transform_2, window_bounds = array<i64: 1, 8>}, {pipeline_mode = #tpu.pipeline_mode<synchronous>, transform_indices = @transform_3, window_bounds = array<i64: 1, 8>}, {transform_indices = @transform_4, window_bounds = array<i64: 512, 8>}]} {
    %c0 = arith.constant 0 : index
    %c0_0 = arith.constant 0 : index
    %0 = vector.load %arg1[%c0, %c0_0] : memref<512x108xf32, #tpu.memory_space<vmem>>, vector<512x108xf32>
    %1 = arith.truncf %0 : vector<512x108xf32> to vector<512x108xbf16>
    %c0_1 = arith.constant 0 : index
    %c0_2 = arith.constant 0 : index
    %2 = vector.load %arg2[%c0_1, %c0_2] : memref<108x8xf32, #tpu.memory_space<vmem>>, vector<108x8xf32>
    %3 = arith.truncf %2 : vector<108x8xf32> to vector<108x8xbf16>
    %cst = arith.constant dense<0.000000e+00> : vector<512x8xf32>
    %4 = tpu.matmul %1, %3, %cst {dimension_numbers = #tpu.dot_dimension_numbers<[1], [0], [0], [1], [0, 0, 1, 1], [], []>} : vector<512x108xbf16>, vector<108x8xbf16>, vector<512x8xf32> -> vector<512x8xf32>
    %cst_3 = arith.constant dense<0.000000e+00> : vector<512xf32>
    %5 = vector.multi_reduction <add>, %4, %cst_3 [1] : vector<512x8xf32> to vector<512xf32>
    %6 = vector.shape_cast %5 : vector<512xf32> to vector<512x1xf32>
    %cst_4 = arith.constant 8.000000e+00 : f32
    %7 = vector.broadcast %cst_4 : f32 to vector<512x1xf32>
    %8 = arith.divf %6, %7 : vector<512x1xf32>
    %9 = vector.broadcast %8 : vector<512x1xf32> to vector<512x8xf32>
    %10 = arith.subf %4, %9 : vector<512x8xf32>
    %11 = arith.mulf %10, %10 : vector<512x8xf32>
    %cst_5 = arith.constant dense<0.000000e+00> : vector<512xf32>
    %12 = vector.multi_reduction <add>, %11, %cst_5 [1] : vector<512x8xf32> to vector<512xf32>
    %13 = vector.shape_cast %12 : vector<512xf32> to vector<512x1xf32>
    %cst_6 = arith.constant 8.000000e+00 : f32
    %14 = vector.broadcast %cst_6 : f32 to vector<512x1xf32>
    %15 = arith.divf %13, %14 : vector<512x1xf32>
    %cst_7 = arith.constant 9.99999974E-6 : f32
    %16 = vector.broadcast %cst_7 : f32 to vector<512x1xf32>
    %17 = arith.addf %15, %16 : vector<512x1xf32>
    %18 = math.rsqrt %17 : vector<512x1xf32>
    %19 = vector.broadcast %18 : vector<512x1xf32> to vector<512x8xf32>
    %20 = arith.mulf %10, %19 : vector<512x8xf32>
    %c0_8 = arith.constant 0 : index
    %c0_9 = arith.constant 0 : index
    %21 = vector.load %arg3[%c0_8, %c0_9] : memref<1x8xf32, #tpu.memory_space<vmem>>, vector<1x8xf32>
    %22 = vector.broadcast %21 : vector<1x8xf32> to vector<512x8xf32>
    %23 = arith.mulf %20, %22 : vector<512x8xf32>
    %c0_10 = arith.constant 0 : index
    %c0_11 = arith.constant 0 : index
    %24 = vector.load %arg4[%c0_10, %c0_11] : memref<1x8xf32, #tpu.memory_space<vmem>>, vector<1x8xf32>
    %25 = vector.broadcast %24 : vector<1x8xf32> to vector<512x8xf32>
    %26 = arith.addf %23, %25 : vector<512x8xf32>
    %c0_12 = arith.constant 0 : index
    %c0_13 = arith.constant 0 : index
    %27 = vector.load %arg5[%c0_12, %c0_13] : memref<512x8xf32, #tpu.memory_space<vmem>>, vector<512x8xf32>
    tpu.vector_store %arg5[%c0_12, %c0_13], %26 {strides = array<i32>} : memref<512x8xf32, #tpu.memory_space<vmem>>, vector<512x8xf32>,
    return
  }
  func.func @transform_0(%arg0: i32) -> (i32, i32) {
    %c0_i32 = arith.constant 0 : i32
    %c0_i32_0 = arith.constant 0 : i32
    return %arg0, %c0_i32 : i32, i32
  }
  func.func @transform_1(%arg0: i32) -> (i32, i32) {
    %c0_i32 = arith.constant 0 : i32
    %c0_i32_0 = arith.constant 0 : i32
    %c0_i32_1 = arith.constant 0 : i32
    return %c0_i32, %c0_i32_0 : i32, i32
  }
  func.func @transform_2(%arg0: i32) -> (i32, i32) {
    %c0_i32 = arith.constant 0 : i32
    %c0_i32_0 = arith.constant 0 : i32
    %c0_i32_1 = arith.constant 0 : i32
    return %c0_i32, %c0_i32_0 : i32, i32
  }
  func.func @transform_3(%arg0: i32) -> (i32, i32) {
    %c0_i32 = arith.constant 0 : i32
    %c0_i32_0 = arith.constant 0 : i32
    %c0_i32_1 = arith.constant 0 : i32
    return %c0_i32, %c0_i32_0 : i32, i32
  }
  func.func @transform_4(%arg0: i32) -> (i32, i32) {
    %c0_i32 = arith.constant 0 : i32
    %c0_i32_0 = arith.constant 0 : i32
    return %arg0, %c0_i32 : i32, i32
  }
}

</mosaic_0001>

<llo_original>
// kernel: tpu_custom_call.1
$region0: #{tpu_custom_call.1}
  #allocation0 [shape = 'u32[]', space=smem, size = 0x4, offset = 0x4, fixed_abs, tag = 'smem constant byte address 0x4 - core index']
  #allocation1 [shape = 'u32[144,128]{1,0:T(1,128)}', space=vmem, size = 0x12000, scoped, tag = 'internal scratch']
  %s0 = inlined_call_operand.vmem [shape: f32[1024,108], index: 0, kind: input, shape index: {}]
  %s1 = inlined_call_operand.vmem [shape: f32[108,8], index: 1, kind: input, shape index: {}]
  %s2 = inlined_call_operand.vmem [shape: f32[1,8], index: 2, kind: input, shape index: {}]
  %s3 = inlined_call_operand.vmem [shape: f32[1,8], index: 3, kind: input, shape index: {}]
  %s4 = inlined_call_operand.vmem [shape: f32[1024,8], index: 4, kind: output, shape index: {}]
  %s5 = sld [smem:[#allocation0]]
  $region49: #{tpu_custom_call.1} parent=0
    _
  %s7 = ssub.s32 1, %s5
  %s8 = scalar_select 0, %s7, %s5
  loop: start=0, step=1, limit=4
  $region2: #{tpu_custom_call.1} parent=0 // loop_pre_header
    _
  $region3: #{tpu_custom_call.1} parent=0 // loop_header
    %s10 = sphi 0, %s14
    %p11 = scmp.ge.s32.totalorder %s10, 4
    %s20 = sphi 0, %s22
    %s23 = sphi 0, %s20
    %s24 = sphi 0, %s23
    %s40 = sphi 0, %s24
    %s44 = sphi 0, %s44
    %s46 = sphi 0, %s44
    %s47 = sphi 0, %s46
    %s61 = sphi 0, %s47
    %s65 = sphi 0, %s65
    %s67 = sphi 0, %s65
    %s68 = sphi 0, %s67
    %s82 = sphi 0, %s68
    %s86 = sphi 0, %s86
    %s88 = sphi 0, %s86
    %s89 = sphi 0, %s88
    %s103 = sphi 0, %s89
    %s109 = sphi 0, %s111
    %s112 = sphi 0, %s109
    %s113 = sphi 0, %s112
    %s129 = sphi 0, %s113
  $region4: #{tpu_custom_call.1} parent=0 // loop_header_branch
    %13 = sbr.rel (%p11) target = $region8
  $region5: #{tpu_custom_call.1} parent=0 // loop_body
    %s15 = ssub.s32 %s10, 1
    %s16 = ssub.s32 %s10, 2
    %s17 = sadd.s32 %s10, 1
    %s18 = ssub.s32 %s10, %s17
    %p19 = scmp.eq.s32.totalorder %s18, 0
    %s21 = sadd.s32 %s20, 1
    %s22 = scalar_select %p19, %s20, %s21
    %p25 = pneg %p19
    %p26 = scmp.eq.s32.totalorder %s10, 1
    %p27 = por %p25, %p26
    %p28 = scmp.ne.s32.totalorder %s20, %s23
    %p29 = scmp.eq.s32.totalorder %s10, 0
    %p30 = por %p28, %p29
    %p31 = scmp.ne.s32.totalorder %s20, %s23
    %p32 = scmp.eq.s32.totalorder %s15, 1
    %p33 = por %p31, %p32
    %p34 = scmp.ne.s32.totalorder %s23, %s24
    %p35 = scmp.eq.s32.totalorder %s15, 0
    %p36 = por %p34, %p35
    %p37 = scmp.ne.s32.totalorder %s23, %s24
    %p38 = scmp.eq.s32.totalorder %s16, 1
    %p39 = por %p37, %p38
    %p41 = scmp.ne.s32.totalorder %s24, %s40
    %p42 = scmp.eq.s32.totalorder %s16, 0
    %p43 = por %p41, %p42
    %s45 = sadd.s32 %s44, 1
    %p48 = scmp.eq.s32.totalorder %s10, 1
    %p49 = scmp.ne.s32.totalorder %s44, %s46
    %p50 = scmp.eq.s32.totalorder %s10, 0
    %p51 = por %p49, %p50
    %p52 = scmp.ne.s32.totalorder %s44, %s46
    %p53 = scmp.eq.s32.totalorder %s15, 1
    %p54 = por %p52, %p53
    %p55 = scmp.ne.s32.totalorder %s46, %s47
    %p56 = scmp.eq.s32.totalorder %s15, 0
    %p57 = por %p55, %p56
    %p58 = scmp.ne.s32.totalorder %s46, %s47
    %p59 = scmp.eq.s32.totalorder %s16, 1
    %p60 = por %p58, %p59
    %p62 = scmp.ne.s32.totalorder %s47, %s61
    %p63 = scmp.eq.s32.totalorder %s16, 0
    %p64 = por %p62, %p63
    %s66 = sadd.s32 %s65, 1
    %p69 = scmp.eq.s32.totalorder %s10, 1
    %p70 = scmp.ne.s32.totalorder %s65, %s67
    %p71 = scmp.eq.s32.totalorder %s10, 0
    %p72 = por %p70, %p71
    %p73 = scmp.ne.s32.totalorder %s65, %s67
    %p74 = scmp.eq.s32.totalorder %s15, 1
    %p75 = por %p73, %p74
    %p76 = scmp.ne.s32.totalorder %s67, %s68
    %p77 = scmp.eq.s32.totalorder %s15, 0
    %p78 = por %p76, %p77
    %p79 = scmp.ne.s32.totalorder %s67, %s68
    %p80 = scmp.eq.s32.totalorder %s16, 1
    %p81 = por %p79, %p80
    %p83 = scmp.ne.s32.totalorder %s68, %s82
    %p84 = scmp.eq.s32.totalorder %s16, 0
    %p85 = por %p83, %p84
    %s87 = sadd.s32 %s86, 1
    %p90 = scmp.eq.s32.totalorder %s10, 1
    %p91 = scmp.ne.s32.totalorder %s86, %s88
    %p92 = scmp.eq.s32.totalorder %s10, 0
    %p93 = por %p91, %p92
    %p94 = scmp.ne.s32.totalorder %s86, %s88
    %p95 = scmp.eq.s32.totalorder %s15, 1
    %p96 = por %p94, %p95
    %p97 = scmp.ne.s32.totalorder %s88, %s89
    %p98 = scmp.eq.s32.totalorder %s15, 0
    %p99 = por %p97, %p98
    %p100 = scmp.ne.s32.totalorder %s88, %s89
    %p101 = scmp.eq.s32.totalorder %s16, 1
    %p102 = por %p100, %p101
    %p104 = scmp.ne.s32.totalorder %s89, %s103
    %p105 = scmp.eq.s32.totalorder %s16, 0
    %p106 = por %p104, %p105
    %s107 = ssub.s32 %s10, %s17
    %p108 = scmp.eq.s32.totalorder %s107, 0
    %s110 = sadd.s32 %s109, 1
    %s111 = scalar_select %p108, %s109, %s110
    %p114 = pneg %p108
    %p115 = scmp.eq.s32.totalorder %s10, 1
    %p116 = por %p114, %p115
    %p117 = scmp.ne.s32.totalorder %s109, %s112
    %p118 = scmp.eq.s32.totalorder %s10, 0
    %p119 = por %p117, %p118
    %p120 = scmp.ne.s32.totalorder %s109, %s112
    %p121 = scmp.eq.s32.totalorder %s15, 1
    %p122 = por %p120, %p121
    %p123 = scmp.ne.s32.totalorder %s112, %s113
    %p124 = scmp.eq.s32.totalorder %s15, 0
    %p125 = por %p123, %p124
    %p126 = scmp.ne.s32.totalorder %s112, %s113
    %p127 = scmp.eq.s32.totalorder %s16, 1
    %p128 = por %p126, %p127
    %p130 = scmp.ne.s32.totalorder %s113, %s129
    %p131 = scmp.eq.s32.totalorder %s16, 0
    %p132 = por %p130, %p131
    %p133 = scmp.le.s32.totalorder 1, %s10
    %p134 = scmp.lt.s32.totalorder %s10, 3
    %p135 = pnand %p133, %p134
    %p136 = pneg %p135
    // Predicated region
    $region9: #{tpu_custom_call.1} parent=5 // pred_check
      _
    $region10: #{tpu_custom_call.1} parent=5 // pred_check_branch
      %138 = sbr.rel (%p135) target = $region12
    $region11: #{tpu_custom_call.1} parent=5 // pred_region
      %s139 = ssub.s32 %s10, 1
      // Predicated region
      $region13: #{tpu_custom_call.1} parent=11 // pred_check
        %p140 = pneg %p57
      $region14: #{tpu_custom_call.1} parent=11 // pred_check_branch
        %142 = sbr.rel (%p140) target = $region16
      $region15: #{tpu_custom_call.1} parent=11 // pred_region
        _
      $region16: #{tpu_custom_call.1} parent=11 // pred_fallthru
        _
      // Predicated region
      $region17: #{tpu_custom_call.1} parent=11 // pred_check
        %p143 = pneg %p78
      $region18: #{tpu_custom_call.1} parent=11 // pred_check_branch
        %145 = sbr.rel (%p143) target = $region20
      $region19: #{tpu_custom_call.1} parent=11 // pred_region
        _
      $region20: #{tpu_custom_call.1} parent=11 // pred_fallthru
        _
      // Predicated region
      $region21: #{tpu_custom_call.1} parent=11 // pred_check
        %p146 = pneg %p99
      $region22: #{tpu_custom_call.1} parent=11 // pred_check_branch
        %148 = sbr.rel (%p146) target = $region24
      $region23: #{tpu_custom_call.1} parent=11 // pred_region
        _
      $region24: #{tpu_custom_call.1} parent=11 // pred_fallthru
        _
    $region12: #{tpu_custom_call.1} parent=5 // pred_fallthru
      _
    %p149 = scmp.lt.s32.totalorder %s10, 2
    // Predicated region
    $region25: #{tpu_custom_call.1} parent=5 // pred_check
      %p150 = pneg %p149
    $region26: #{tpu_custom_call.1} parent=5 // pred_check_branch
      %152 = sbr.rel (%p150) target = $region28
    $region27: #{tpu_custom_call.1} parent=5 // pred_region
      // Predicated region
      $region29: #{tpu_custom_call.1} parent=27 // pred_check
        %p153 = pneg %p30
      $region30: #{tpu_custom_call.1} parent=27 // pred_check_branch
        %155 = sbr.rel (%p153) target = $region32
      $region31: #{tpu_custom_call.1} parent=27 // pred_region
        %s156 = smul.u32 64, %s10
        %p157 = scmp.lt.s32.totalorder %s156, 127
        %s158 = scalar_select %p157, %s156, 127
        %s159 = smul.addr %s158, 8
        %s160 = scalar_lea.vmem %s0, %s159
        %s161 = smul.u32 64, %s10
      $region32: #{tpu_custom_call.1} parent=27 // pred_fallthru
        _
    $region28: #{tpu_custom_call.1} parent=5 // pred_fallthru
      _
    %p162 = scmp.le.s32.totalorder 1, %s10
    %p163 = scmp.lt.s32.totalorder %s10, 3
    %p164 = pnand %p162, %p163
    %p165 = pneg %p164
    // Predicated region
    $region33: #{tpu_custom_call.1} parent=5 // pred_check
      _
    $region34: #{tpu_custom_call.1} parent=5 // pred_check_branch
      %167 = sbr.rel (%p164) target = $region36
    $region35: #{tpu_custom_call.1} parent=5 // pred_region
      %s168 = ssub.s32 %s10, 1
      %s169 = smul.u32 64, %s15
      %p170 = scmp.lt.s32.totalorder %s169, 127
      %s171 = scalar_select %p170, %s169, 127
      %s172 = smul.addr %s171, 8
      %s173 = scalar_lea.vmem %s0, %s172
      %p174 = pneg %p36
      %p175 = pneg %p33
      %p176 = pneg %p57
      %p177 = pneg %p54
      %p178 = pneg %p78
      %p179 = pneg %p75
      %p180 = pneg %p99
      %p181 = pneg %p96
      %p182 = pneg %p125
      %p183 = pneg %p122
      %s184 = smul.u32 64, %s15
      %p185 = scmp.lt.s32.totalorder %s184, 127
      %s186 = scalar_select %p185, %s184, 127
      %s187 = smul.addr %s186, 8
      %s188 = scalar_lea.vmem %s4, %s187
      %s189 = smul.u32 64, %s15
      %p190 = scmp.lt.s32.totalorder %s189, 127
      %s191 = scalar_select %p190, %s189, 127
      %s192 = smul.addr %s191, 8
      %s193 = scalar_lea.vmem %s0, %s192
      %s194 = smul.u32 64, %s15
      %s195 = smul.u32 64, %s15
      %p196 = scmp.lt.s32.totalorder %s195, 127
      %s197 = scalar_select %p196, %s195, 127
      %s198 = smul.addr %s197, 8
      %s199 = scalar_lea.vmem %s4, %s198
      %s200 = smul.u32 64, %s15
      %v202 = vld [vmem:[%s193] sm:$0xff]
      %v203 = vld [vmem:[%s193 + $0x8] sm:$0xff]
      %v204 = vld [vmem:[%s193 + $0x10] sm:$0xff]
      %v205 = vld [vmem:[%s193 + $0x18] sm:$0xff]
      %v206 = vld [vmem:[%s193 + $0x20] sm:$0xff]
      %v207 = vld [vmem:[%s193 + $0x28] sm:$0xff]
      %v208 = vld [vmem:[%s193 + $0x30] sm:$0xff]
      %v209 = vld [vmem:[%s193 + $0x38] sm:$0xff]
      %v210 = vld [vmem:[%s193 + $0x40] sm:$0xff]
      %v211 = vld [vmem:[%s193 + $0x48] sm:$0xff]
      %v212 = vld [vmem:[%s193 + $0x50] sm:$0xff]
      %v213 = vld [vmem:[%s193 + $0x58] sm:$0xff]
      %v214 = vld [vmem:[%s193 + $0x60] sm:$0xff]
      %v215 = vld [vmem:[%s193 + $0x68] sm:$0xff]
      %v216 = vld [vmem:[%s193 + $0x70] sm:$0xff]
      %v217 = vld [vmem:[%s193 + $0x78] sm:$0xff]
      %v218 = vld [vmem:[%s193 + $0x80] sm:$0xff]
      %v219 = vld [vmem:[%s193 + $0x88] sm:$0xff]
      %v220 = vld [vmem:[%s193 + $0x90] sm:$0xff]
      %v221 = vld [vmem:[%s193 + $0x98] sm:$0xff]
      %v222 = vld [vmem:[%s193 + $0xa0] sm:$0xff]
      %v223 = vld [vmem:[%s193 + $0xa8] sm:$0xff]
      %v224 = vld [vmem:[%s193 + $0xb0] sm:$0xff]
      %v225 = vld [vmem:[%s193 + $0xb8] sm:$0xff]
      %v226 = vld [vmem:[%s193 + $0xc0] sm:$0xff]
      %v227 = vld [vmem:[%s193 + $0xc8] sm:$0xff]
      %v228 = vld [vmem:[%s193 + $0xd0] sm:$0xff]
      %v229 = vld [vmem:[%s193 + $0xd8] sm:$0xff]
      %v230 = vld [vmem:[%s193 + $0xe0] sm:$0xff]
      %v231 = vld [vmem:[%s193 + $0xe8] sm:$0xff]
      %v232 = vld [vmem:[%s193 + $0xf0] sm:$0xff]
      %v233 = vld [vmem:[%s193 + $0xf8] sm:$0xff]
      %v234 = vld [vmem:[%s193 + $0x100] sm:$0xff]
      %v235 = vld [vmem:[%s193 + $0x108] sm:$0xff]
      %v236 = vld [vmem:[%s193 + $0x110] sm:$0xff]
      %v237 = vld [vmem:[%s193 + $0x118] sm:$0xff]
      %v238 = vld [vmem:[%s193 + $0x120] sm:$0xff]
      %v239 = vld [vmem:[%s193 + $0x128] sm:$0xff]
      %v240 = vld [vmem:[%s193 + $0x130] sm:$0xff]
      %v241 = vld [vmem:[%s193 + $0x138] sm:$0xff]
      %v242 = vld [vmem:[%s193 + $0x140] sm:$0xff]
      %v243 = vld [vmem:[%s193 + $0x148] sm:$0xff]
      %v244 = vld [vmem:[%s193 + $0x150] sm:$0xff]
      %v245 = vld [vmem:[%s193 + $0x158] sm:$0xff]
      %v246 = vld [vmem:[%s193 + $0x160] sm:$0xff]
      %v247 = vld [vmem:[%s193 + $0x168] sm:$0xff]
      %v248 = vld [vmem:[%s193 + $0x170] sm:$0xff]
      %v249 = vld [vmem:[%s193 + $0x178] sm:$0xff]
      %v250 = vld [vmem:[%s193 + $0x180] sm:$0xff]
      %v251 = vld [vmem:[%s193 + $0x188] sm:$0xff]
      %v252 = vld [vmem:[%s193 + $0x190] sm:$0xff]
      %v253 = vld [vmem:[%s193 + $0x198] sm:$0xff]
      %v254 = vld [vmem:[%s193 + $0x1a0] sm:$0xff]
      %v255 = vld [vmem:[%s193 + $0x1a8] sm:$0xff]
      %v256 = vld [vmem:[%s193 + $0x1b0] sm:$0xff]
      %v257 = vld [vmem:[%s193 + $0x1b8] sm:$0xff]
      %v258 = vld [vmem:[%s193 + $0x1c0] sm:$0xff]
      %v259 = vld [vmem:[%s193 + $0x1c8] sm:$0xff]
      %v260 = vld [vmem:[%s193 + $0x1d0] sm:$0xff]
      %v261 = vld [vmem:[%s193 + $0x1d8] sm:$0xff]
      %v262 = vld [vmem:[%s193 + $0x1e0] sm:$0xff]
      %v263 = vld [vmem:[%s193 + $0x1e8] sm:$0xff]
      %v264 = vld [vmem:[%s193 + $0x1f0] sm:$0xff]
      %v265 = vld [vmem:[%s193 + $0x1f8] sm:$0xff]
      %v266 = vpack.c.bf16 %v203, %v202
      %v267 = vpack.c.bf16 %v205, %v204
      %v268 = vpack.c.bf16 %v207, %v206
      %v269 = vpack.c.bf16 %v209, %v208
      %v270 = vpack.c.bf16 %v211, %v210
      %v271 = vpack.c.bf16 %v213, %v212
      %v272 = vpack.c.bf16 %v215, %v214
      %v273 = vpack.c.bf16 %v217, %v216
      %v274 = vpack.c.bf16 %v219, %v218
      %v275 = vpack.c.bf16 %v221, %v220
      %v276 = vpack.c.bf16 %v223, %v222
      %v277 = vpack.c.bf16 %v225, %v224
      %v278 = vpack.c.bf16 %v227, %v226
      %v279 = vpack.c.bf16 %v229, %v228
      %v280 = vpack.c.bf16 %v231, %v230
      %v281 = vpack.c.bf16 %v233, %v232
      %v282 = vpack.c.bf16 %v235, %v234
      %v283 = vpack.c.bf16 %v237, %v236
      %v284 = vpack.c.bf16 %v239, %v238
      %v285 = vpack.c.bf16 %v241, %v240
      %v286 = vpack.c.bf16 %v243, %v242
      %v287 = vpack.c.bf16 %v245, %v244
      %v288 = vpack.c.bf16 %v247, %v246
      %v289 = vpack.c.bf16 %v249, %v248
      %v290 = vpack.c.bf16 %v251, %v250
      %v291 = vpack.c.bf16 %v253, %v252
      %v292 = vpack.c.bf16 %v255, %v254
      %v293 = vpack.c.bf16 %v257, %v256
      %v294 = vpack.c.bf16 %v259, %v258
      %v295 = vpack.c.bf16 %v261, %v260
      %v296 = vpack.c.bf16 %v263, %v262
      %v297 = vpack.c.bf16 %v265, %v264
      %v298 = vld [vmem:[%s1] sm:$0xff]
      %v299 = vld [vmem:[%s1 + $0x8] sm:$0xff]
      %v300 = vld [vmem:[%s1 + $0x10] sm:$0xff]
      %v301 = vld [vmem:[%s1 + $0x18] sm:$0xff]
      %v302 = vld [vmem:[%s1 + $0x20] sm:$0xff]
      %v303 = vld [vmem:[%s1 + $0x28] sm:$0xff]
      %v304 = vld [vmem:[%s1 + $0x30] sm:$0xff]
      %v305 = vld [vmem:[%s1 + $0x38] sm:$0xff]
      %v306 = vld [vmem:[%s1 + $0x40] sm:$0xff]
      %v307 = vld [vmem:[%s1 + $0x48] sm:$0xff]
      %v308 = vld [vmem:[%s1 + $0x50] sm:$0xff]
      %v309 = vld [vmem:[%s1 + $0x58] sm:$0xff]
      %v310 = vld [vmem:[%s1 + $0x60] sm:$0xff]
      %v311 = vld [vmem:[%s1 + $0x68] sm:$0xf]
      %v312 = vpack.c.bf16 %v299, %v298
      %v313 = vpack.c.bf16 %v301, %v300
      %v314 = vpack.c.bf16 %v303, %v302
      %v315 = vpack.c.bf16 %v305, %v304
      %v316 = vpack.c.bf16 %v307, %v306
      %v317 = vpack.c.bf16 %v309, %v308
      %v318 = vpack.c.bf16 %v311, %v310
      %vm319 = vcmask 883712
      %v321 = vsel %vm319, %v266, 0
      %v324 = vsel %vm319, %v267, 0
      %v327 = vsel %vm319, %v268, 0
      %v330 = vsel %vm319, %v269, 0
      %v333 = vsel %vm319, %v270, 0
      %v336 = vsel %vm319, %v271, 0
      %v339 = vsel %vm319, %v272, 0
      %v342 = vsel %vm319, %v273, 0
      %v345 = vsel %vm319, %v274, 0
      %v348 = vsel %vm319, %v275, 0
      %v351 = vsel %vm319, %v276, 0
      %v354 = vsel %vm319, %v277, 0
      %v357 = vsel %vm319, %v278, 0
      %v360 = vsel %vm319, %v279, 0
      %v363 = vsel %vm319, %v280, 0
      %v366 = vsel %vm319, %v281, 0
      %v369 = vsel %vm319, %v282, 0
      %v372 = vsel %vm319, %v283, 0
      %v375 = vsel %vm319, %v284, 0
      %v378 = vsel %vm319, %v285, 0
      %v381 = vsel %vm319, %v286, 0
      %v384 = vsel %vm319, %v287, 0
      %v387 = vsel %vm319, %v288, 0
      %v390 = vsel %vm319, %v289, 0
      %v393 = vsel %vm319, %v290, 0
      %v396 = vsel %vm319, %v291, 0
      %v399 = vsel %vm319, %v292, 0
      %v402 = vsel %vm319, %v293, 0
      %v405 = vsel %vm319, %v294, 0
      %v408 = vsel %vm319, %v295, 0
      %v411 = vsel %vm319, %v296, 0
      %v414 = vsel %vm319, %v297, 0
      %vm416 = vcmask 1045504
      %v418 = vsel %vm416, %v318, 0
      %420 = vmatprep.subr.bf16.mxu0 0
      %421 = vmatpush1.bf16.msra.mxu0 0
      %422 = vmatprep.subr.bf16.mxu0 0
      %423 = vmatpush1.bf16.msra.mxu0 %v418
      %424 = vmatprep.subr.bf16.mxu0 0
      %425 = vmatpush1.bf16.msra.mxu0 %v317
      %426 = vmatprep.subr.bf16.mxu0 0
      %427 = vmatpush1.bf16.msra.mxu0 %v316
      %428 = vmatprep.subr.bf16.mxu0 0
      %429 = vmatpush1.bf16.msra.mxu0 %v315
      %430 = vmatprep.subr.bf16.mxu0 0
      %431 = vmatpush1.bf16.msra.mxu0 %v314
      %432 = vmatprep.subr.bf16.mxu0 0
      %433 = vmatpush1.bf16.msra.mxu0 %v313
      %434 = vmatprep.subr.bf16.mxu0 0
      %435 = vmatpush1.bf16.msra.mxu0 %v312
      %436 = vmatprep.subr.bf16.mxu0 0
      %437 = vmatpush2.bf16.msra.mxu0 0
      %438 = vmatprep.subr.bf16.mxu0 0
      %439 = vmatpush2.bf16.msra.mxu0 0
      %440 = vmatprep.subr.bf16.mxu0 0
      %441 = vmatpush2.bf16.msra.mxu0 0
      %442 = vmatprep.subr.bf16.mxu0 0
      %443 = vmatpush2.bf16.msra.mxu0 0
      %444 = vmatprep.subr.bf16.mxu0 0
      %445 = vmatpush2.bf16.msra.mxu0 0
      %446 = vmatprep.subr.bf16.mxu0 0
      %447 = vmatpush2.bf16.msra.mxu0 0
      %448 = vmatprep.subr.bf16.mxu0 0
      %449 = vmatpush2.bf16.msra.mxu0 0
      %450 = vmatprep.subr.bf16.mxu0 0
      %451 = vmatpush2.bf16.msra.mxu0 0
      %452 = vmatprep.mubr.bf16.mxu0 0
      %453 = vmatmul.mubr.bf16.gmra.mxu0 %v321
      %v454 = vpop.f32.mrf.mxu0
      %v455 = vadd.f32 0.0, %v454
      %v456 = vpop.f32.mrf.mxu0
      %v457 = vpop.f32.mrf.mxu0
      %v458 = vadd.f32 0.0, %v457
      %v459 = vpop.f32.mrf.mxu0
      %460 = vmatprep.mubr.bf16.mxu0 0
      %461 = vmatmul.mubr.bf16.gmra.mxu0 %v324
      %v462 = vpop.f32.mrf.mxu0
      %v463 = vadd.f32 0.0, %v462
      %v464 = vpop.f32.mrf.mxu0
      %v465 = vpop.f32.mrf.mxu0
      %v466 = vadd.f32 0.0, %v465
      %v467 = vpop.f32.mrf.mxu0
      %468 = vmatprep.mubr.bf16.mxu0 0
      %469 = vmatmul.mubr.bf16.gmra.mxu0 %v327
      %v470 = vpop.f32.mrf.mxu0
      %v471 = vadd.f32 0.0, %v470
      %v472 = vpop.f32.mrf.mxu0
      %v473 = vpop.f32.mrf.mxu0
      %v474 = vadd.f32 0.0, %v473
      %v475 = vpop.f32.mrf.mxu0
      %476 = vmatprep.mubr.bf16.mxu0 0
      %477 = vmatmul.mubr.bf16.gmra.mxu0 %v330
      %v478 = vpop.f32.mrf.mxu0
      %v479 = vadd.f32 0.0, %v478
      %v480 = vpop.f32.mrf.mxu0
      %v481 = vpop.f32.mrf.mxu0
      %v482 = vadd.f32 0.0, %v481
      %v483 = vpop.f32.mrf.mxu0
      %484 = vmatprep.mubr.bf16.mxu0 0
      %485 = vmatmul.mubr.bf16.gmra.mxu0 %v333
      %v486 = vpop.f32.mrf.mxu0
      %v487 = vadd.f32 0.0, %v486
      %v488 = vpop.f32.mrf.mxu0
      %v489 = vpop.f32.mrf.mxu0
      %v490 = vadd.f32 0.0, %v489
      %v491 = vpop.f32.mrf.mxu0
      %492 = vmatprep.mubr.bf16.mxu0 0
      %493 = vmatmul.mubr.bf16.gmra.mxu0 %v336
      %v494 = vpop.f32.mrf.mxu0
      %v495 = vadd.f32 0.0, %v494
      %v496 = vpop.f32.mrf.mxu0
      %v497 = vpop.f32.mrf.mxu0
      %v498 = vadd.f32 0.0, %v497
      %v499 = vpop.f32.mrf.mxu0
      %500 = vmatprep.mubr.bf16.mxu0 0
      %501 = vmatmul.mubr.bf16.gmra.mxu0 %v339
      %v502 = vpop.f32.mrf.mxu0
      %v503 = vadd.f32 0.0, %v502
      %v504 = vpop.f32.mrf.mxu0
      %v505 = vpop.f32.mrf.mxu0
      %v506 = vadd.f32 0.0, %v505
      %v507 = vpop.f32.mrf.mxu0
      %508 = vmatprep.mubr.bf16.mxu0 0
      %509 = vmatmul.mubr.bf16.gmra.mxu0 %v342
      %v510 = vpop.f32.mrf.mxu0
      %v511 = vadd.f32 0.0, %v510
      %v512 = vpop.f32.mrf.mxu0
      %v513 = vpop.f32.mrf.mxu0
      %v514 = vadd.f32 0.0, %v513
      %v515 = vpop.f32.mrf.mxu0
      %516 = vmatprep.mubr.bf16.mxu0 0
      %517 = vmatmul.mubr.bf16.gmra.mxu0 %v345
      %v518 = vpop.f32.mrf.mxu0
      %v519 = vadd.f32 0.0, %v518
      %v520 = vpop.f32.mrf.mxu0
      %v521 = vpop.f32.mrf.mxu0
      %v522 = vadd.f32 0.0, %v521
      %v523 = vpop.f32.mrf.mxu0
      %524 = vmatprep.mubr.bf16.mxu0 0
      %525 = vmatmul.mubr.bf16.gmra.mxu0 %v348
      %v526 = vpop.f32.mrf.mxu0
      %v527 = vadd.f32 0.0, %v526
      %v528 = vpop.f32.mrf.mxu0
      %v529 = vpop.f32.mrf.mxu0
      %v530 = vadd.f32 0.0, %v529
      %v531 = vpop.f32.mrf.mxu0
      %532 = vmatprep.mubr.bf16.mxu0 0
      %533 = vmatmul.mubr.bf16.gmra.mxu0 %v351
      %v534 = vpop.f32.mrf.mxu0
      %v535 = vadd.f32 0.0, %v534
      %v536 = vpop.f32.mrf.mxu0
      %v537 = vpop.f32.mrf.mxu0
      %v538 = vadd.f32 0.0, %v537
      %v539 = vpop.f32.mrf.mxu0
      %540 = vmatprep.mubr.bf16.mxu0 0
      %541 = vmatmul.mubr.bf16.gmra.mxu0 %v354
      %v542 = vpop.f32.mrf.mxu0
      %v543 = vadd.f32 0.0, %v542
      %v544 = vpop.f32.mrf.mxu0
      %v545 = vpop.f32.mrf.mxu0
      %v546 = vadd.f32 0.0, %v545
      %v547 = vpop.f32.mrf.mxu0
      %548 = vmatprep.mubr.bf16.mxu0 0
      %549 = vmatmul.mubr.bf16.gmra.mxu0 %v357
      %v550 = vpop.f32.mrf.mxu0
      %v551 = vadd.f32 0.0, %v550
      %v552 = vpop.f32.mrf.mxu0
      %v553 = vpop.f32.mrf.mxu0
      %v554 = vadd.f32 0.0, %v553
      %v555 = vpop.f32.mrf.mxu0
      %556 = vmatprep.mubr.bf16.mxu0 0
      %557 = vmatmul.mubr.bf16.gmra.mxu0 %v360
      %v558 = vpop.f32.mrf.mxu0
      %v559 = vadd.f32 0.0, %v558
      %v560 = vpop.f32.mrf.mxu0
      %v561 = vpop.f32.mrf.mxu0
      %v562 = vadd.f32 0.0, %v561
      %v563 = vpop.f32.mrf.mxu0
      %564 = vmatprep.mubr.bf16.mxu0 0
      %565 = vmatmul.mubr.bf16.gmra.mxu0 %v363
      %v566 = vpop.f32.mrf.mxu0
      %v567 = vadd.f32 0.0, %v566
      %v568 = vpop.f32.mrf.mxu0
      %v569 = vpop.f32.mrf.mxu0
      %v570 = vadd.f32 0.0, %v569
      %v571 = vpop.f32.mrf.mxu0
      %572 = vmatprep.mubr.bf16.mxu0 0
      %573 = vmatmul.mubr.bf16.gmra.mxu0 %v366
      %v574 = vpop.f32.mrf.mxu0
      %v575 = vadd.f32 0.0, %v574
      %v576 = vpop.f32.mrf.mxu0
      %v577 = vpop.f32.mrf.mxu0
      %v578 = vadd.f32 0.0, %v577
      %v579 = vpop.f32.mrf.mxu0
      %580 = vmatprep.mubr.bf16.mxu0 0
      %581 = vmatmul.mubr.bf16.gmra.mxu0 %v369
      %v582 = vpop.f32.mrf.mxu0
      %v583 = vadd.f32 0.0, %v582
      %v584 = vpop.f32.mrf.mxu0
      %v585 = vpop.f32.mrf.mxu0
      %v586 = vadd.f32 0.0, %v585
      %v587 = vpop.f32.mrf.mxu0
      %588 = vmatprep.mubr.bf16.mxu0 0
      %589 = vmatmul.mubr.bf16.gmra.mxu0 %v372
      %v590 = vpop.f32.mrf.mxu0
      %v591 = vadd.f32 0.0, %v590
      %v592 = vpop.f32.mrf.mxu0
      %v593 = vpop.f32.mrf.mxu0
      %v594 = vadd.f32 0.0, %v593
      %v595 = vpop.f32.mrf.mxu0
      %596 = vmatprep.mubr.bf16.mxu0 0
      %597 = vmatmul.mubr.bf16.gmra.mxu0 %v375
      %v598 = vpop.f32.mrf.mxu0
      %v599 = vadd.f32 0.0, %v598
      %v600 = vpop.f32.mrf.mxu0
      %v601 = vpop.f32.mrf.mxu0
      %v602 = vadd.f32 0.0, %v601
      %v603 = vpop.f32.mrf.mxu0
      %604 = vmatprep.mubr.bf16.mxu0 0
      %605 = vmatmul.mubr.bf16.gmra.mxu0 %v378
      %v606 = vpop.f32.mrf.mxu0
      %v607 = vadd.f32 0.0, %v606
      %v608 = vpop.f32.mrf.mxu0
      %v609 = vpop.f32.mrf.mxu0
      %v610 = vadd.f32 0.0, %v609
      %v611 = vpop.f32.mrf.mxu0
      %612 = vmatprep.mubr.bf16.mxu0 0
      %613 = vmatmul.mubr.bf16.gmra.mxu0 %v381
      %v614 = vpop.f32.mrf.mxu0
      %v615 = vadd.f32 0.0, %v614
      %v616 = vpop.f32.mrf.mxu0
      %v617 = vpop.f32.mrf.mxu0
      %v618 = vadd.f32 0.0, %v617
      %v619 = vpop.f32.mrf.mxu0
      %620 = vmatprep.mubr.bf16.mxu0 0
      %621 = vmatmul.mubr.bf16.gmra.mxu0 %v384
      %v622 = vpop.f32.mrf.mxu0
      %v623 = vadd.f32 0.0, %v622
      %v624 = vpop.f32.mrf.mxu0
      %v625 = vpop.f32.mrf.mxu0
      %v626 = vadd.f32 0.0, %v625
      %v627 = vpop.f32.mrf.mxu0
      %628 = vmatprep.mubr.bf16.mxu0 0
      %629 = vmatmul.mubr.bf16.gmra.mxu0 %v387
      %v630 = vpop.f32.mrf.mxu0
      %v631 = vadd.f32 0.0, %v630
      %v632 = vpop.f32.mrf.mxu0
      %v633 = vpop.f32.mrf.mxu0
      %v634 = vadd.f32 0.0, %v633
      %v635 = vpop.f32.mrf.mxu0
      %636 = vmatprep.mubr.bf16.mxu0 0
      %637 = vmatmul.mubr.bf16.gmra.mxu0 %v390
      %v638 = vpop.f32.mrf.mxu0
      %v639 = vadd.f32 0.0, %v638
      %v640 = vpop.f32.mrf.mxu0
      %v641 = vpop.f32.mrf.mxu0
      %v642 = vadd.f32 0.0, %v641
      %v643 = vpop.f32.mrf.mxu0
      %644 = vmatprep.mubr.bf16.mxu0 0
      %645 = vmatmul.mubr.bf16.gmra.mxu0 %v393
      %v646 = vpop.f32.mrf.mxu0
      %v647 = vadd.f32 0.0, %v646
      %v648 = vpop.f32.mrf.mxu0
      %v649 = vpop.f32.mrf.mxu0
      %v650 = vadd.f32 0.0, %v649
      %v651 = vpop.f32.mrf.mxu0
      %652 = vmatprep.mubr.bf16.mxu0 0
      %653 = vmatmul.mubr.bf16.gmra.mxu0 %v396
      %v654 = vpop.f32.mrf.mxu0
      %v655 = vadd.f32 0.0, %v654
      %v656 = vpop.f32.mrf.mxu0
      %v657 = vpop.f32.mrf.mxu0
      %v658 = vadd.f32 0.0, %v657
      %v659 = vpop.f32.mrf.mxu0
      %660 = vmatprep.mubr.bf16.mxu0 0
      %661 = vmatmul.mubr.bf16.gmra.mxu0 %v399
      %v662 = vpop.f32.mrf.mxu0
      %v663 = vadd.f32 0.0, %v662
      %v664 = vpop.f32.mrf.mxu0
      %v665 = vpop.f32.mrf.mxu0
      %v666 = vadd.f32 0.0, %v665
      %v667 = vpop.f32.mrf.mxu0
      %668 = vmatprep.mubr.bf16.mxu0 0
      %669 = vmatmul.mubr.bf16.gmra.mxu0 %v402
      %v670 = vpop.f32.mrf.mxu0
      %v671 = vadd.f32 0.0, %v670
      %v672 = vpop.f32.mrf.mxu0
      %v673 = vpop.f32.mrf.mxu0
      %v674 = vadd.f32 0.0, %v673
      %v675 = vpop.f32.mrf.mxu0
      %676 = vmatprep.mubr.bf16.mxu0 0
      %677 = vmatmul.mubr.bf16.gmra.mxu0 %v405
      %v678 = vpop.f32.mrf.mxu0
      %v679 = vadd.f32 0.0, %v678
      %v680 = vpop.f32.mrf.mxu0
      %v681 = vpop.f32.mrf.mxu0
      %v682 = vadd.f32 0.0, %v681
      %v683 = vpop.f32.mrf.mxu0
      %684 = vmatprep.mubr.bf16.mxu0 0
      %685 = vmatmul.mubr.bf16.gmra.mxu0 %v408
      %v686 = vpop.f32.mrf.mxu0
      %v687 = vadd.f32 0.0, %v686
      %v688 = vpop.f32.mrf.mxu0
      %v689 = vpop.f32.mrf.mxu0
      %v690 = vadd.f32 0.0, %v689
      %v691 = vpop.f32.mrf.mxu0
      %692 = vmatprep.mubr.bf16.mxu0 0
      %693 = vmatmul.mubr.bf16.gmra.mxu0 %v411
      %v694 = vpop.f32.mrf.mxu0
      %v695 = vadd.f32 0.0, %v694
      %v696 = vpop.f32.mrf.mxu0
      %v697 = vpop.f32.mrf.mxu0
      %v698 = vadd.f32 0.0, %v697
      %v699 = vpop.f32.mrf.mxu0
      %700 = vmatprep.mubr.bf16.mxu0 0
      %701 = vmatmul.mubr.bf16.gmra.mxu0 %v414
      %v702 = vpop.f32.mrf.mxu0
      %v703 = vadd.f32 0.0, %v702
      %v704 = vpop.f32.mrf.mxu0
      %v705 = vpop.f32.mrf.mxu0
      %v706 = vadd.f32 0.0, %v705
      %v707 = vpop.f32.mrf.mxu0
      %708 = vdwg.mxu0
      %vm709 = vcmask 64512
      %v710 = vsel %vm709, %v455, 0.0
      %711 = vadd.xlane.f32.xlu0 %v710
      %v712 = vpop.xlane.xlu0 %711
      %v713 = vsel %vm709, %v458, 0.0
      %714 = vadd.xlane.f32.xlu0 %v713
      %v715 = vpop.xlane.xlu0 %714
      %v716 = vsel %vm709, %v463, 0.0
      %717 = vadd.xlane.f32.xlu0 %v716
      %v718 = vpop.xlane.xlu0 %717
      %v719 = vsel %vm709, %v466, 0.0
      %720 = vadd.xlane.f32.xlu0 %v719
      %v721 = vpop.xlane.xlu0 %720
      %v722 = vsel %vm709, %v471, 0.0
      %723 = vadd.xlane.f32.xlu0 %v722
      %v724 = vpop.xlane.xlu0 %723
      %v725 = vsel %vm709, %v474, 0.0
      %726 = vadd.xlane.f32.xlu0 %v725
      %v727 = vpop.xlane.xlu0 %726
      %v728 = vsel %vm709, %v479, 0.0
      %729 = vadd.xlane.f32.xlu0 %v728
      %v730 = vpop.xlane.xlu0 %729
      %v731 = vsel %vm709, %v482, 0.0
      %732 = vadd.xlane.f32.xlu0 %v731
      %v733 = vpop.xlane.xlu0 %732
      %v734 = vsel %vm709, %v487, 0.0
      %735 = vadd.xlane.f32.xlu0 %v734
      %v736 = vpop.xlane.xlu0 %735
      %v737 = vsel %vm709, %v490, 0.0
      %738 = vadd.xlane.f32.xlu0 %v737
      %v739 = vpop.xlane.xlu0 %738
      %v740 = vsel %vm709, %v495, 0.0
      %741 = vadd.xlane.f32.xlu0 %v740
      %v742 = vpop.xlane.xlu0 %741
      %v743 = vsel %vm709, %v498, 0.0
      %744 = vadd.xlane.f32.xlu0 %v743
      %v745 = vpop.xlane.xlu0 %744
      %v746 = vsel %vm709, %v503, 0.0
      %747 = vadd.xlane.f32.xlu0 %v746
      %v748 = vpop.xlane.xlu0 %747
      %v749 = vsel %vm709, %v506, 0.0
      %750 = vadd.xlane.f32.xlu0 %v749
      %v751 = vpop.xlane.xlu0 %750
      %v752 = vsel %vm709, %v511, 0.0
      %753 = vadd.xlane.f32.xlu0 %v752
      %v754 = vpop.xlane.xlu0 %753
      %v755 = vsel %vm709, %v514, 0.0
      %756 = vadd.xlane.f32.xlu0 %v755
      %v757 = vpop.xlane.xlu0 %756
      %v758 = vsel %vm709, %v519, 0.0
      %759 = vadd.xlane.f32.xlu0 %v758
      %v760 = vpop.xlane.xlu0 %759
      %v761 = vsel %vm709, %v522, 0.0
      %762 = vadd.xlane.f32.xlu0 %v761
      %v763 = vpop.xlane.xlu0 %762
      %v764 = vsel %vm709, %v527, 0.0
      %765 = vadd.xlane.f32.xlu0 %v764
      %v766 = vpop.xlane.xlu0 %765
      %v767 = vsel %vm709, %v530, 0.0
      %768 = vadd.xlane.f32.xlu0 %v767
      %v769 = vpop.xlane.xlu0 %768
      %v770 = vsel %vm709, %v535, 0.0
      %771 = vadd.xlane.f32.xlu0 %v770
      %v772 = vpop.xlane.xlu0 %771
      %v773 = vsel %vm709, %v538, 0.0
      %774 = vadd.xlane.f32.xlu0 %v773
      %v775 = vpop.xlane.xlu0 %774
      %v776 = vsel %vm709, %v543, 0.0
      %777 = vadd.xlane.f32.xlu0 %v776
      %v778 = vpop.xlane.xlu0 %777
      %v779 = vsel %vm709, %v546, 0.0
      %780 = vadd.xlane.f32.xlu0 %v779
      %v781 = vpop.xlane.xlu0 %780
      %v782 = vsel %vm709, %v551, 0.0
      %783 = vadd.xlane.f32.xlu0 %v782
      %v784 = vpop.xlane.xlu0 %783
      %v785 = vsel %vm709, %v554, 0.0
      %786 = vadd.xlane.f32.xlu0 %v785
      %v787 = vpop.xlane.xlu0 %786
      %v788 = vsel %vm709, %v559, 0.0
      %789 = vadd.xlane.f32.xlu0 %v788
      %v790 = vpop.xlane.xlu0 %789
      %v791 = vsel %vm709, %v562, 0.0
      %792 = vadd.xlane.f32.xlu0 %v791
      %v793 = vpop.xlane.xlu0 %792
      %v794 = vsel %vm709, %v567, 0.0
      %795 = vadd.xlane.f32.xlu0 %v794
      %v796 = vpop.xlane.xlu0 %795
      %v797 = vsel %vm709, %v570, 0.0
      %798 = vadd.xlane.f32.xlu0 %v797
      %v799 = vpop.xlane.xlu0 %798
      %v800 = vsel %vm709, %v575, 0.0
      %801 = vadd.xlane.f32.xlu0 %v800
      %v802 = vpop.xlane.xlu0 %801
      %v803 = vsel %vm709, %v578, 0.0
      %804 = vadd.xlane.f32.xlu0 %v803
      %v805 = vpop.xlane.xlu0 %804
      %v806 = vsel %vm709, %v583, 0.0
      %807 = vadd.xlane.f32.xlu0 %v806
      %v808 = vpop.xlane.xlu0 %807
      %v809 = vsel %vm709, %v586, 0.0
      %810 = vadd.xlane.f32.xlu0 %v809
      %v811 = vpop.xlane.xlu0 %810
      %v812 = vsel %vm709, %v591, 0.0
      %813 = vadd.xlane.f32.xlu0 %v812
      %v814 = vpop.xlane.xlu0 %813
      %v815 = vsel %vm709, %v594, 0.0
      %816 = vadd.xlane.f32.xlu0 %v815
      %v817 = vpop.xlane.xlu0 %816
      %v818 = vsel %vm709, %v599, 0.0
      %819 = vadd.xlane.f32.xlu0 %v818
      %v820 = vpop.xlane.xlu0 %819
      %v821 = vsel %vm709, %v602, 0.0
      %822 = vadd.xlane.f32.xlu0 %v821
      %v823 = vpop.xlane.xlu0 %822
      %v824 = vsel %vm709, %v607, 0.0
      %825 = vadd.xlane.f32.xlu0 %v824
      %v826 = vpop.xlane.xlu0 %825
      %v827 = vsel %vm709, %v610, 0.0
      %828 = vadd.xlane.f32.xlu0 %v827
      %v829 = vpop.xlane.xlu0 %828
      %v830 = vsel %vm709, %v615, 0.0
      %831 = vadd.xlane.f32.xlu0 %v830
      %v832 = vpop.xlane.xlu0 %831
      %v833 = vsel %vm709, %v618, 0.0
      %834 = vadd.xlane.f32.xlu0 %v833
      %v835 = vpop.xlane.xlu0 %834
      %v836 = vsel %vm709, %v623, 0.0
      %837 = vadd.xlane.f32.xlu0 %v836
      %v838 = vpop.xlane.xlu0 %837
      %v839 = vsel %vm709, %v626, 0.0
      %840 = vadd.xlane.f32.xlu0 %v839
      %v841 = vpop.xlane.xlu0 %840
      %v842 = vsel %vm709, %v631, 0.0
      %843 = vadd.xlane.f32.xlu0 %v842
      %v844 = vpop.xlane.xlu0 %843
      %v845 = vsel %vm709, %v634, 0.0
      %846 = vadd.xlane.f32.xlu0 %v845
      %v847 = vpop.xlane.xlu0 %846
      %v848 = vsel %vm709, %v639, 0.0
      %849 = vadd.xlane.f32.xlu0 %v848
      %v850 = vpop.xlane.xlu0 %849
      %v851 = vsel %vm709, %v642, 0.0
      %852 = vadd.xlane.f32.xlu0 %v851
      %v853 = vpop.xlane.xlu0 %852
      %v854 = vsel %vm709, %v647, 0.0
      %855 = vadd.xlane.f32.xlu0 %v854
      %v856 = vpop.xlane.xlu0 %855
      %v857 = vsel %vm709, %v650, 0.0
      %858 = vadd.xlane.f32.xlu0 %v857
      %v859 = vpop.xlane.xlu0 %858
      %v860 = vsel %vm709, %v655, 0.0
      %861 = vadd.xlane.f32.xlu0 %v860
      %v862 = vpop.xlane.xlu0 %861
      %v863 = vsel %vm709, %v658, 0.0
      %864 = vadd.xlane.f32.xlu0 %v863
      %v865 = vpop.xlane.xlu0 %864
      %v866 = vsel %vm709, %v663, 0.0
      %867 = vadd.xlane.f32.xlu0 %v866
      %v868 = vpop.xlane.xlu0 %867
      %v869 = vsel %vm709, %v666, 0.0
      %870 = vadd.xlane.f32.xlu0 %v869
      %v871 = vpop.xlane.xlu0 %870
      %v872 = vsel %vm709, %v671, 0.0
      %873 = vadd.xlane.f32.xlu0 %v872
      %v874 = vpop.xlane.xlu0 %873
      %v875 = vsel %vm709, %v674, 0.0
      %876 = vadd.xlane.f32.xlu0 %v875
      %v877 = vpop.xlane.xlu0 %876
      %v878 = vsel %vm709, %v679, 0.0
      %879 = vadd.xlane.f32.xlu0 %v878
      %v880 = vpop.xlane.xlu0 %879
      %v881 = vsel %vm709, %v682, 0.0
      %882 = vadd.xlane.f32.xlu0 %v881
      %v883 = vpop.xlane.xlu0 %882
      %v884 = vsel %vm709, %v687, 0.0
      %885 = vadd.xlane.f32.xlu0 %v884
      %v886 = vpop.xlane.xlu0 %885
      %v887 = vsel %vm709, %v690, 0.0
      %888 = vadd.xlane.f32.xlu0 %v887
      %v889 = vpop.xlane.xlu0 %888
      %v890 = vsel %vm709, %v695, 0.0
      %891 = vadd.xlane.f32.xlu0 %v890
      %v892 = vpop.xlane.xlu0 %891
      %v893 = vsel %vm709, %v698, 0.0
      %894 = vadd.xlane.f32.xlu0 %v893
      %v895 = vpop.xlane.xlu0 %894
      %v896 = vsel %vm709, %v703, 0.0
      %897 = vadd.xlane.f32.xlu0 %v896
      %v898 = vpop.xlane.xlu0 %897
      %v899 = vsel %vm709, %v706, 0.0
      %900 = vadd.xlane.f32.xlu0 %v899
      %v901 = vpop.xlane.xlu0 %900
      %v902 = vrcp.pop 8.0
      %v903 = vmul.f32 %v712, %v902
      %v904 = vmul.f32 %v715, %v902
      %v905 = vmul.f32 %v718, %v902
      %v906 = vmul.f32 %v721, %v902
      %v907 = vmul.f32 %v724, %v902
      %v908 = vmul.f32 %v727, %v902
      %v909 = vmul.f32 %v730, %v902
      %v910 = vmul.f32 %v733, %v902
      %v911 = vmul.f32 %v736, %v902
      %v912 = vmul.f32 %v739, %v902
      %v913 = vmul.f32 %v742, %v902
      %v914 = vmul.f32 %v745, %v902
      %v915 = vmul.f32 %v748, %v902
      %v916 = vmul.f32 %v751, %v902
      %v917 = vmul.f32 %v754, %v902
      %v918 = vmul.f32 %v757, %v902
      %v919 = vmul.f32 %v760, %v902
      %v920 = vmul.f32 %v763, %v902
      %v921 = vmul.f32 %v766, %v902
      %v922 = vmul.f32 %v769, %v902
      %v923 = vmul.f32 %v772, %v902
      %v924 = vmul.f32 %v775, %v902
      %v925 = vmul.f32 %v778, %v902
      %v926 = vmul.f32 %v781, %v902
      %v927 = vmul.f32 %v784, %v902
      %v928 = vmul.f32 %v787, %v902
      %v929 = vmul.f32 %v790, %v902
      %v930 = vmul.f32 %v793, %v902
      %v931 = vmul.f32 %v796, %v902
      %v932 = vmul.f32 %v799, %v902
      %v933 = vmul.f32 %v802, %v902
      %v934 = vmul.f32 %v805, %v902
      %v935 = vmul.f32 %v808, %v902
      %v936 = vmul.f32 %v811, %v902
      %v937 = vmul.f32 %v814, %v902
      %v938 = vmul.f32 %v817, %v902
      %v939 = vmul.f32 %v820, %v902
      %v940 = vmul.f32 %v823, %v902
      %v941 = vmul.f32 %v826, %v902
      %v942 = vmul.f32 %v829, %v902
      %v943 = vmul.f32 %v832, %v902
      %v944 = vmul.f32 %v835, %v902
      %v945 = vmul.f32 %v838, %v902
      %v946 = vmul.f32 %v841, %v902
      %v947 = vmul.f32 %v844, %v902
      %v948 = vmul.f32 %v847, %v902
      %v949 = vmul.f32 %v850, %v902
      %v950 = vmul.f32 %v853, %v902
      %v951 = vmul.f32 %v856, %v902
      %v952 = vmul.f32 %v859, %v902
      %v953 = vmul.f32 %v862, %v902
      %v954 = vmul.f32 %v865, %v902
      %v955 = vmul.f32 %v868, %v902
      %v956 = vmul.f32 %v871, %v902
      %v957 = vmul.f32 %v874, %v902
      %v958 = vmul.f32 %v877, %v902
      %v959 = vmul.f32 %v880, %v902
      %v960 = vmul.f32 %v883, %v902
      %v961 = vmul.f32 %v886, %v902
      %v962 = vmul.f32 %v889, %v902
      %v963 = vmul.f32 %v892, %v902
      %v964 = vmul.f32 %v895, %v902
      %v965 = vmul.f32 %v898, %v902
      %v966 = vmul.f32 %v901, %v902
      %v967 = vsub.f32 %v455, %v903
      %v968 = vsub.f32 %v458, %v904
      %v969 = vsub.f32 %v463, %v905
      %v970 = vsub.f32 %v466, %v906
      %v971 = vsub.f32 %v471, %v907
      %v972 = vsub.f32 %v474, %v908
      %v973 = vsub.f32 %v479, %v909
      %v974 = vsub.f32 %v482, %v910
      %v975 = vsub.f32 %v487, %v911
      %v976 = vsub.f32 %v490, %v912
      %v977 = vsub.f32 %v495, %v913
      %v978 = vsub.f32 %v498, %v914
      %v979 = vsub.f32 %v503, %v915
      %v980 = vsub.f32 %v506, %v916
      %v981 = vsub.f32 %v511, %v917
      %v982 = vsub.f32 %v514, %v918
      %v983 = vsub.f32 %v519, %v919
      %v984 = vsub.f32 %v522, %v920
      %v985 = vsub.f32 %v527, %v921
      %v986 = vsub.f32 %v530, %v922
      %v987 = vsub.f32 %v535, %v923
      %v988 = vsub.f32 %v538, %v924
      %v989 = vsub.f32 %v543, %v925
      %v990 = vsub.f32 %v546, %v926
      %v991 = vsub.f32 %v551, %v927
      %v992 = vsub.f32 %v554, %v928
      %v993 = vsub.f32 %v559, %v929
      %v994 = vsub.f32 %v562, %v930
      %v995 = vsub.f32 %v567, %v931
      %v996 = vsub.f32 %v570, %v932
      %v997 = vsub.f32 %v575, %v933
      %v998 = vsub.f32 %v578, %v934
      %v999 = vsub.f32 %v583, %v935
      %v1000 = vsub.f32 %v586, %v936
      %v1001 = vsub.f32 %v591, %v937
      %v1002 = vsub.f32 %v594, %v938
      %v1003 = vsub.f32 %v599, %v939
      %v1004 = vsub.f32 %v602, %v940
      %v1005 = vsub.f32 %v607, %v941
      %v1006 = vsub.f32 %v610, %v942
      %v1007 = vsub.f32 %v615, %v943
      %v1008 = vsub.f32 %v618, %v944
      %v1009 = vsub.f32 %v623, %v945
      %v1010 = vsub.f32 %v626, %v946
      %v1011 = vsub.f32 %v631, %v947
      %v1012 = vsub.f32 %v634, %v948
      %v1013 = vsub.f32 %v639, %v949
      %v1014 = vsub.f32 %v642, %v950
      %v1015 = vsub.f32 %v647, %v951
      %v1016 = vsub.f32 %v650, %v952
      %v1017 = vsub.f32 %v655, %v953
      %v1018 = vsub.f32 %v658, %v954
      %v1019 = vsub.f32 %v663, %v955
      %v1020 = vsub.f32 %v666, %v956
      %v1021 = vsub.f32 %v671, %v957
      %v1022 = vsub.f32 %v674, %v958
      %v1023 = vsub.f32 %v679, %v959
      %v1024 = vsub.f32 %v682, %v960
      %v1025 = vsub.f32 %v687, %v961
      %v1026 = vsub.f32 %v690, %v962
      %v1027 = vsub.f32 %v695, %v963
      %v1028 = vsub.f32 %v698, %v964
      %v1029 = vsub.f32 %v703, %v965
      %v1030 = vsub.f32 %v706, %v966
      %v1031 = vmul.f32 %v967, %v967
      %v1032 = vmul.f32 %v968, %v968
      %v1033 = vmul.f32 %v969, %v969
      %v1034 = vmul.f32 %v970, %v970
      %v1035 = vmul.f32 %v971, %v971
      %v1036 = vmul.f32 %v972, %v972
      %v1037 = vmul.f32 %v973, %v973
      %v1038 = vmul.f32 %v974, %v974
      %v1039 = vmul.f32 %v975, %v975
      %v1040 = vmul.f32 %v976, %v976
      %v1041 = vmul.f32 %v977, %v977
      %v1042 = vmul.f32 %v978, %v978
      %v1043 = vmul.f32 %v979, %v979
      %v1044 = vmul.f32 %v980, %v980
      %v1045 = vmul.f32 %v981, %v981
      %v1046 = vmul.f32 %v982, %v982
      %v1047 = vmul.f32 %v983, %v983
      %v1048 = vmul.f32 %v984, %v984
      %v1049 = vmul.f32 %v985, %v985
      %v1050 = vmul.f32 %v986, %v986
      %v1051 = vmul.f32 %v987, %v987
      %v1052 = vmul.f32 %v988, %v988
      %v1053 = vmul.f32 %v989, %v989
      %v1054 = vmul.f32 %v990, %v990
      %v1055 = vmul.f32 %v991, %v991
      %v1056 = vmul.f32 %v992, %v992
      %v1057 = vmul.f32 %v993, %v993
      %v1058 = vmul.f32 %v994, %v994
      %v1059 = vmul.f32 %v995, %v995
      %v1060 = vmul.f32 %v996, %v996
      %v1061 = vmul.f32 %v997, %v997
      %v1062 = vmul.f32 %v998, %v998
      %v1063 = vmul.f32 %v999, %v999
      %v1064 = vmul.f32 %v1000, %v1000
      %v1065 = vmul.f32 %v1001, %v1001
      %v1066 = vmul.f32 %v1002, %v1002
      %v1067 = vmul.f32 %v1003, %v1003
      %v1068 = vmul.f32 %v1004, %v1004
      %v1069 = vmul.f32 %v1005, %v1005
      %v1070 = vmul.f32 %v1006, %v1006
      %v1071 = vmul.f32 %v1007, %v1007
      %v1072 = vmul.f32 %v1008, %v1008
      %v1073 = vmul.f32 %v1009, %v1009
      %v1074 = vmul.f32 %v1010, %v1010
      %v1075 = vmul.f32 %v1011, %v1011
      %v1076 = vmul.f32 %v1012, %v1012
      %v1077 = vmul.f32 %v1013, %v1013
      %v1078 = vmul.f32 %v1014, %v1014
      %v1079 = vmul.f32 %v1015, %v1015
      %v1080 = vmul.f32 %v1016, %v1016
      %v1081 = vmul.f32 %v1017, %v1017
      %v1082 = vmul.f32 %v1018, %v1018
      %v1083 = vmul.f32 %v1019, %v1019
      %v1084 = vmul.f32 %v1020, %v1020
      %v1085 = vmul.f32 %v1021, %v1021
      %v1086 = vmul.f32 %v1022, %v1022
      %v1087 = vmul.f32 %v1023, %v1023
      %v1088 = vmul.f32 %v1024, %v1024
      %v1089 = vmul.f32 %v1025, %v1025
      %v1090 = vmul.f32 %v1026, %v1026
      %v1091 = vmul.f32 %v1027, %v1027
      %v1092 = vmul.f32 %v1028, %v1028
      %v1093 = vmul.f32 %v1029, %v1029
      %v1094 = vmul.f32 %v1030, %v1030
      %v1095 = vsel %vm709, %v1031, 0.0
      %1096 = vadd.xlane.f32.xlu0 %v1095
      %v1097 = vpop.xlane.xlu0 %1096
      %v1098 = vsel %vm709, %v1032, 0.0
      %1099 = vadd.xlane.f32.xlu0 %v1098
      %v1100 = vpop.xlane.xlu0 %1099
      %v1101 = vsel %vm709, %v1033, 0.0
      %1102 = vadd.xlane.f32.xlu0 %v1101
      %v1103 = vpop.xlane.xlu0 %1102
      %v1104 = vsel %vm709, %v1034, 0.0
      %1105 = vadd.xlane.f32.xlu0 %v1104
      %v1106 = vpop.xlane.xlu0 %1105
      %v1107 = vsel %vm709, %v1035, 0.0
      %1108 = vadd.xlane.f32.xlu0 %v1107
      %v1109 = vpop.xlane.xlu0 %1108
      %v1110 = vsel %vm709, %v1036, 0.0
      %1111 = vadd.xlane.f32.xlu0 %v1110
      %v1112 = vpop.xlane.xlu0 %1111
      %v1113 = vsel %vm709, %v1037, 0.0
      %1114 = vadd.xlane.f32.xlu0 %v1113
      %v1115 = vpop.xlane.xlu0 %1114
      %v1116 = vsel %vm709, %v1038, 0.0
      %1117 = vadd.xlane.f32.xlu0 %v1116
      %v1118 = vpop.xlane.xlu0 %1117
      %v1119 = vsel %vm709, %v1039, 0.0
      %1120 = vadd.xlane.f32.xlu0 %v1119
      %v1121 = vpop.xlane.xlu0 %1120
      %v1122 = vsel %vm709, %v1040, 0.0
      %1123 = vadd.xlane.f32.xlu0 %v1122
      %v1124 = vpop.xlane.xlu0 %1123
      %v1125 = vsel %vm709, %v1041, 0.0
      %1126 = vadd.xlane.f32.xlu0 %v1125
      %v1127 = vpop.xlane.xlu0 %1126
      %v1128 = vsel %vm709, %v1042, 0.0
      %1129 = vadd.xlane.f32.xlu0 %v1128
      %v1130 = vpop.xlane.xlu0 %1129
      %v1131 = vsel %vm709, %v1043, 0.0
      %1132 = vadd.xlane.f32.xlu0 %v1131
      %v1133 = vpop.xlane.xlu0 %1132
      %v1134 = vsel %vm709, %v1044, 0.0
      %1135 = vadd.xlane.f32.xlu0 %v1134
      %v1136 = vpop.xlane.xlu0 %1135
      %v1137 = vsel %vm709, %v1045, 0.0
      %1138 = vadd.xlane.f32.xlu0 %v1137
      %v1139 = vpop.xlane.xlu0 %1138
      %v1140 = vsel %vm709, %v1046, 0.0
      %1141 = vadd.xlane.f32.xlu0 %v1140
      %v1142 = vpop.xlane.xlu0 %1141
      %v1143 = vsel %vm709, %v1047, 0.0
      %1144 = vadd.xlane.f32.xlu0 %v1143
      %v1145 = vpop.xlane.xlu0 %1144
      %v1146 = vsel %vm709, %v1048, 0.0
      %1147 = vadd.xlane.f32.xlu0 %v1146
      %v1148 = vpop.xlane.xlu0 %1147
      %v1149 = vsel %vm709, %v1049, 0.0
      %1150 = vadd.xlane.f32.xlu0 %v1149
      %v1151 = vpop.xlane.xlu0 %1150
      %v1152 = vsel %vm709, %v1050, 0.0
      %1153 = vadd.xlane.f32.xlu0 %v1152
      %v1154 = vpop.xlane.xlu0 %1153
      %v1155 = vsel %vm709, %v1051, 0.0
      %1156 = vadd.xlane.f32.xlu0 %v1155
      %v1157 = vpop.xlane.xlu0 %1156
      %v1158 = vsel %vm709, %v1052, 0.0
      %1159 = vadd.xlane.f32.xlu0 %v1158
      %v1160 = vpop.xlane.xlu0 %1159
      %v1161 = vsel %vm709, %v1053, 0.0
      %1162 = vadd.xlane.f32.xlu0 %v1161
      %v1163 = vpop.xlane.xlu0 %1162
      %v1164 = vsel %vm709, %v1054, 0.0
      %1165 = vadd.xlane.f32.xlu0 %v1164
      %v1166 = vpop.xlane.xlu0 %1165
      %v1167 = vsel %vm709, %v1055, 0.0
      %1168 = vadd.xlane.f32.xlu0 %v1167
      %v1169 = vpop.xlane.xlu0 %1168
      %v1170 = vsel %vm709, %v1056, 0.0
      %1171 = vadd.xlane.f32.xlu0 %v1170
      %v1172 = vpop.xlane.xlu0 %1171
      %v1173 = vsel %vm709, %v1057, 0.0
      %1174 = vadd.xlane.f32.xlu0 %v1173
      %v1175 = vpop.xlane.xlu0 %1174
      %v1176 = vsel %vm709, %v1058, 0.0
      %1177 = vadd.xlane.f32.xlu0 %v1176
      %v1178 = vpop.xlane.xlu0 %1177
      %v1179 = vsel %vm709, %v1059, 0.0
      %1180 = vadd.xlane.f32.xlu0 %v1179
      %v1181 = vpop.xlane.xlu0 %1180
      %v1182 = vsel %vm709, %v1060, 0.0
      %1183 = vadd.xlane.f32.xlu0 %v1182
      %v1184 = vpop.xlane.xlu0 %1183
      %v1185 = vsel %vm709, %v1061, 0.0
      %1186 = vadd.xlane.f32.xlu0 %v1185
      %v1187 = vpop.xlane.xlu0 %1186
      %v1188 = vsel %vm709, %v1062, 0.0
      %1189 = vadd.xlane.f32.xlu0 %v1188
      %v1190 = vpop.xlane.xlu0 %1189
      %v1191 = vsel %vm709, %v1063, 0.0
      %1192 = vadd.xlane.f32.xlu0 %v1191
      %v1193 = vpop.xlane.xlu0 %1192
      %v1194 = vsel %vm709, %v1064, 0.0
      %1195 = vadd.xlane.f32.xlu0 %v1194
      %v1196 = vpop.xlane.xlu0 %1195
      %v1197 = vsel %vm709, %v1065, 0.0
      %1198 = vadd.xlane.f32.xlu0 %v1197
      %v1199 = vpop.xlane.xlu0 %1198
      %v1200 = vsel %vm709, %v1066, 0.0
      %1201 = vadd.xlane.f32.xlu0 %v1200
      %v1202 = vpop.xlane.xlu0 %1201
      %v1203 = vsel %vm709, %v1067, 0.0
      %1204 = vadd.xlane.f32.xlu0 %v1203
      %v1205 = vpop.xlane.xlu0 %1204
      %v1206 = vsel %vm709, %v1068, 0.0
      %1207 = vadd.xlane.f32.xlu0 %v1206
      %v1208 = vpop.xlane.xlu0 %1207
      %v1209 = vsel %vm709, %v1069, 0.0
      %1210 = vadd.xlane.f32.xlu0 %v1209
      %v1211 = vpop.xlane.xlu0 %1210
      %v1212 = vsel %vm709, %v1070, 0.0
      %1213 = vadd.xlane.f32.xlu0 %v1212
      %v1214 = vpop.xlane.xlu0 %1213
      %v1215 = vsel %vm709, %v1071, 0.0
      %1216 = vadd.xlane.f32.xlu0 %v1215
      %v1217 = vpop.xlane.xlu0 %1216
      %v1218 = vsel %vm709, %v1072, 0.0
      %1219 = vadd.xlane.f32.xlu0 %v1218
      %v1220 = vpop.xlane.xlu0 %1219
      %v1221 = vsel %vm709, %v1073, 0.0
      %1222 = vadd.xlane.f32.xlu0 %v1221
      %v1223 = vpop.xlane.xlu0 %1222
      %v1224 = vsel %vm709, %v1074, 0.0
      %1225 = vadd.xlane.f32.xlu0 %v1224
      %v1226 = vpop.xlane.xlu0 %1225
      %v1227 = vsel %vm709, %v1075, 0.0
      %1228 = vadd.xlane.f32.xlu0 %v1227
      %v1229 = vpop.xlane.xlu0 %1228
      %v1230 = vsel %vm709, %v1076, 0.0
      %1231 = vadd.xlane.f32.xlu0 %v1230
      %v1232 = vpop.xlane.xlu0 %1231
      %v1233 = vsel %vm709, %v1077, 0.0
      %1234 = vadd.xlane.f32.xlu0 %v1233
      %v1235 = vpop.xlane.xlu0 %1234
      %v1236 = vsel %vm709, %v1078, 0.0
      %1237 = vadd.xlane.f32.xlu0 %v1236
      %v1238 = vpop.xlane.xlu0 %1237
      %v1239 = vsel %vm709, %v1079, 0.0
      %1240 = vadd.xlane.f32.xlu0 %v1239
      %v1241 = vpop.xlane.xlu0 %1240
      %v1242 = vsel %vm709, %v1080, 0.0
      %1243 = vadd.xlane.f32.xlu0 %v1242
      %v1244 = vpop.xlane.xlu0 %1243
      %v1245 = vsel %vm709, %v1081, 0.0
      %1246 = vadd.xlane.f32.xlu0 %v1245
      %v1247 = vpop.xlane.xlu0 %1246
      %v1248 = vsel %vm709, %v1082, 0.0
      %1249 = vadd.xlane.f32.xlu0 %v1248
      %v1250 = vpop.xlane.xlu0 %1249
      %v1251 = vsel %vm709, %v1083, 0.0
      %1252 = vadd.xlane.f32.xlu0 %v1251
      %v1253 = vpop.xlane.xlu0 %1252
      %v1254 = vsel %vm709, %v1084, 0.0
      %1255 = vadd.xlane.f32.xlu0 %v1254
      %v1256 = vpop.xlane.xlu0 %1255
      %v1257 = vsel %vm709, %v1085, 0.0
      %1258 = vadd.xlane.f32.xlu0 %v1257
      %v1259 = vpop.xlane.xlu0 %1258
      %v1260 = vsel %vm709, %v1086, 0.0
      %1261 = vadd.xlane.f32.xlu0 %v1260
      %v1262 = vpop.xlane.xlu0 %1261
      %v1263 = vsel %vm709, %v1087, 0.0
      %1264 = vadd.xlane.f32.xlu0 %v1263
      %v1265 = vpop.xlane.xlu0 %1264
      %v1266 = vsel %vm709, %v1088, 0.0
      %1267 = vadd.xlane.f32.xlu0 %v1266
      %v1268 = vpop.xlane.xlu0 %1267
      %v1269 = vsel %vm709, %v1089, 0.0
      %1270 = vadd.xlane.f32.xlu0 %v1269
      %v1271 = vpop.xlane.xlu0 %1270
      %v1272 = vsel %vm709, %v1090, 0.0
      %1273 = vadd.xlane.f32.xlu0 %v1272
      %v1274 = vpop.xlane.xlu0 %1273
      %v1275 = vsel %vm709, %v1091, 0.0
      %1276 = vadd.xlane.f32.xlu0 %v1275
      %v1277 = vpop.xlane.xlu0 %1276
      %v1278 = vsel %vm709, %v1092, 0.0
      %1279 = vadd.xlane.f32.xlu0 %v1278
      %v1280 = vpop.xlane.xlu0 %1279
      %v1281 = vsel %vm709, %v1093, 0.0
      %1282 = vadd.xlane.f32.xlu0 %v1281
      %v1283 = vpop.xlane.xlu0 %1282
      %v1284 = vsel %vm709, %v1094, 0.0
      %1285 = vadd.xlane.f32.xlu0 %v1284
      %v1286 = vpop.xlane.xlu0 %1285
      %v1287 = vmul.f32 %v1097, %v902
      %v1288 = vmul.f32 %v1100, %v902
      %v1289 = vmul.f32 %v1103, %v902
      %v1290 = vmul.f32 %v1106, %v902
      %v1291 = vmul.f32 %v1109, %v902
      %v1292 = vmul.f32 %v1112, %v902
      %v1293 = vmul.f32 %v1115, %v902
      %v1294 = vmul.f32 %v1118, %v902
      %v1295 = vmul.f32 %v1121, %v902
      %v1296 = vmul.f32 %v1124, %v902
      %v1297 = vmul.f32 %v1127, %v902
      %v1298 = vmul.f32 %v1130, %v902
      %v1299 = vmul.f32 %v1133, %v902
      %v1300 = vmul.f32 %v1136, %v902
      %v1301 = vmul.f32 %v1139, %v902
      %v1302 = vmul.f32 %v1142, %v902
      %v1303 = vmul.f32 %v1145, %v902
      %v1304 = vmul.f32 %v1148, %v902
      %v1305 = vmul.f32 %v1151, %v902
      %v1306 = vmul.f32 %v1154, %v902
      %v1307 = vmul.f32 %v1157, %v902
      %v1308 = vmul.f32 %v1160, %v902
      %v1309 = vmul.f32 %v1163, %v902
      %v1310 = vmul.f32 %v1166, %v902
      %v1311 = vmul.f32 %v1169, %v902
      %v1312 = vmul.f32 %v1172, %v902
      %v1313 = vmul.f32 %v1175, %v902
      %v1314 = vmul.f32 %v1178, %v902
      %v1315 = vmul.f32 %v1181, %v902
      %v1316 = vmul.f32 %v1184, %v902
      %v1317 = vmul.f32 %v1187, %v902
      %v1318 = vmul.f32 %v1190, %v902
      %v1319 = vmul.f32 %v1193, %v902
      %v1320 = vmul.f32 %v1196, %v902
      %v1321 = vmul.f32 %v1199, %v902
      %v1322 = vmul.f32 %v1202, %v902
      %v1323 = vmul.f32 %v1205, %v902
      %v1324 = vmul.f32 %v1208, %v902
      %v1325 = vmul.f32 %v1211, %v902
      %v1326 = vmul.f32 %v1214, %v902
      %v1327 = vmul.f32 %v1217, %v902
      %v1328 = vmul.f32 %v1220, %v902
      %v1329 = vmul.f32 %v1223, %v902
      %v1330 = vmul.f32 %v1226, %v902
      %v1331 = vmul.f32 %v1229, %v902
      %v1332 = vmul.f32 %v1232, %v902
      %v1333 = vmul.f32 %v1235, %v902
      %v1334 = vmul.f32 %v1238, %v902
      %v1335 = vmul.f32 %v1241, %v902
      %v1336 = vmul.f32 %v1244, %v902
      %v1337 = vmul.f32 %v1247, %v902
      %v1338 = vmul.f32 %v1250, %v902
      %v1339 = vmul.f32 %v1253, %v902
      %v1340 = vmul.f32 %v1256, %v902
      %v1341 = vmul.f32 %v1259, %v902
      %v1342 = vmul.f32 %v1262, %v902
      %v1343 = vmul.f32 %v1265, %v902
      %v1344 = vmul.f32 %v1268, %v902
      %v1345 = vmul.f32 %v1271, %v902
      %v1346 = vmul.f32 %v1274, %v902
      %v1347 = vmul.f32 %v1277, %v902
      %v1348 = vmul.f32 %v1280, %v902
      %v1349 = vmul.f32 %v1283, %v902
      %v1350 = vmul.f32 %v1286, %v902
      %v1351 = vadd.f32 %v1287, 1e-05
      %v1352 = vadd.f32 %v1288, 1e-05
      %v1353 = vadd.f32 %v1289, 1e-05
      %v1354 = vadd.f32 %v1290, 1e-05
      %v1355 = vadd.f32 %v1291, 1e-05
      %v1356 = vadd.f32 %v1292, 1e-05
      %v1357 = vadd.f32 %v1293, 1e-05
      %v1358 = vadd.f32 %v1294, 1e-05
      %v1359 = vadd.f32 %v1295, 1e-05
      %v1360 = vadd.f32 %v1296, 1e-05
      %v1361 = vadd.f32 %v1297, 1e-05
      %v1362 = vadd.f32 %v1298, 1e-05
      %v1363 = vadd.f32 %v1299, 1e-05
      %v1364 = vadd.f32 %v1300, 1e-05
      %v1365 = vadd.f32 %v1301, 1e-05
      %v1366 = vadd.f32 %v1302, 1e-05
      %v1367 = vadd.f32 %v1303, 1e-05
      %v1368 = vadd.f32 %v1304, 1e-05
      %v1369 = vadd.f32 %v1305, 1e-05
      %v1370 = vadd.f32 %v1306, 1e-05
      %v1371 = vadd.f32 %v1307, 1e-05
      %v1372 = vadd.f32 %v1308, 1e-05
      %v1373 = vadd.f32 %v1309, 1e-05
      %v1374 = vadd.f32 %v1310, 1e-05
      %v1375 = vadd.f32 %v1311, 1e-05
      %v1376 = vadd.f32 %v1312, 1e-05
      %v1377 = vadd.f32 %v1313, 1e-05
      %v1378 = vadd.f32 %v1314, 1e-05
      %v1379 = vadd.f32 %v1315, 1e-05
      %v1380 = vadd.f32 %v1316, 1e-05
      %v1381 = vadd.f32 %v1317, 1e-05
      %v1382 = vadd.f32 %v1318, 1e-05
      %v1383 = vadd.f32 %v1319, 1e-05
      %v1384 = vadd.f32 %v1320, 1e-05
      %v1385 = vadd.f32 %v1321, 1e-05
      %v1386 = vadd.f32 %v1322, 1e-05
      %v1387 = vadd.f32 %v1323, 1e-05
      %v1388 = vadd.f32 %v1324, 1e-05
      %v1389 = vadd.f32 %v1325, 1e-05
      %v1390 = vadd.f32 %v1326, 1e-05
      %v1391 = vadd.f32 %v1327, 1e-05
      %v1392 = vadd.f32 %v1328, 1e-05
      %v1393 = vadd.f32 %v1329, 1e-05
      %v1394 = vadd.f32 %v1330, 1e-05
      %v1395 = vadd.f32 %v1331, 1e-05
      %v1396 = vadd.f32 %v1332, 1e-05
      %v1397 = vadd.f32 %v1333, 1e-05
      %v1398 = vadd.f32 %v1334, 1e-05
      %v1399 = vadd.f32 %v1335, 1e-05
      %v1400 = vadd.f32 %v1336, 1e-05
      %v1401 = vadd.f32 %v1337, 1e-05
      %v1402 = vadd.f32 %v1338, 1e-05
      %v1403 = vadd.f32 %v1339, 1e-05
      %v1404 = vadd.f32 %v1340, 1e-05
      %v1405 = vadd.f32 %v1341, 1e-05
      %v1406 = vadd.f32 %v1342, 1e-05
      %v1407 = vadd.f32 %v1343, 1e-05
      %v1408 = vadd.f32 %v1344, 1e-05
      %v1409 = vadd.f32 %v1345, 1e-05
      %v1410 = vadd.f32 %v1346, 1e-05
      %v1411 = vadd.f32 %v1347, 1e-05
      %v1412 = vadd.f32 %v1348, 1e-05
      %v1413 = vadd.f32 %v1349, 1e-05
      %v1414 = vadd.f32 %v1350, 1e-05
      %v1415 = vrsqrt.pop %v1351
      %v1416 = vrsqrt.pop %v1352
      %v1417 = vrsqrt.pop %v1353
      %v1418 = vrsqrt.pop %v1354
      %v1419 = vrsqrt.pop %v1355
      %v1420 = vrsqrt.pop %v1356
      %v1421 = vrsqrt.pop %v1357
      %v1422 = vrsqrt.pop %v1358
      %v1423 = vrsqrt.pop %v1359
      %v1424 = vrsqrt.pop %v1360
      %v1425 = vrsqrt.pop %v1361
      %v1426 = vrsqrt.pop %v1362
      %v1427 = vrsqrt.pop %v1363
      %v1428 = vrsqrt.pop %v1364
      %v1429 = vrsqrt.pop %v1365
      %v1430 = vrsqrt.pop %v1366
      %v1431 = vrsqrt.pop %v1367
      %v1432 = vrsqrt.pop %v1368
      %v1433 = vrsqrt.pop %v1369
      %v1434 = vrsqrt.pop %v1370
      %v1435 = vrsqrt.pop %v1371
      %v1436 = vrsqrt.pop %v1372
      %v1437 = vrsqrt.pop %v1373
      %v1438 = vrsqrt.pop %v1374
      %v1439 = vrsqrt.pop %v1375
      %v1440 = vrsqrt.pop %v1376
      %v1441 = vrsqrt.pop %v1377
      %v1442 = vrsqrt.pop %v1378
      %v1443 = vrsqrt.pop %v1379
      %v1444 = vrsqrt.pop %v1380
      %v1445 = vrsqrt.pop %v1381
      %v1446 = vrsqrt.pop %v1382
      %v1447 = vrsqrt.pop %v1383
      %v1448 = vrsqrt.pop %v1384
      %v1449 = vrsqrt.pop %v1385
      %v1450 = vrsqrt.pop %v1386
      %v1451 = vrsqrt.pop %v1387
      %v1452 = vrsqrt.pop %v1388
      %v1453 = vrsqrt.pop %v1389
      %v1454 = vrsqrt.pop %v1390
      %v1455 = vrsqrt.pop %v1391
      %v1456 = vrsqrt.pop %v1392
      %v1457 = vrsqrt.pop %v1393
      %v1458 = vrsqrt.pop %v1394
      %v1459 = vrsqrt.pop %v1395
      %v1460 = vrsqrt.pop %v1396
      %v1461 = vrsqrt.pop %v1397
      %v1462 = vrsqrt.pop %v1398
      %v1463 = vrsqrt.pop %v1399
      %v1464 = vrsqrt.pop %v1400
      %v1465 = vrsqrt.pop %v1401
      %v1466 = vrsqrt.pop %v1402
      %v1467 = vrsqrt.pop %v1403
      %v1468 = vrsqrt.pop %v1404
      %v1469 = vrsqrt.pop %v1405
      %v1470 = vrsqrt.pop %v1406
      %v1471 = vrsqrt.pop %v1407
      %v1472 = vrsqrt.pop %v1408
      %v1473 = vrsqrt.pop %v1409
      %v1474 = vrsqrt.pop %v1410
      %v1475 = vrsqrt.pop %v1411
      %v1476 = vrsqrt.pop %v1412
      %v1477 = vrsqrt.pop %v1413
      %v1478 = vrsqrt.pop %v1414
      %v1479 = vmul.f32 %v967, %v1415
      %v1480 = vmul.f32 %v968, %v1416
      %v1481 = vmul.f32 %v969, %v1417
      %v1482 = vmul.f32 %v970, %v1418
      %v1483 = vmul.f32 %v971, %v1419
      %v1484 = vmul.f32 %v972, %v1420
      %v1485 = vmul.f32 %v973, %v1421
      %v1486 = vmul.f32 %v974, %v1422
      %v1487 = vmul.f32 %v975, %v1423
      %v1488 = vmul.f32 %v976, %v1424
      %v1489 = vmul.f32 %v977, %v1425
      %v1490 = vmul.f32 %v978, %v1426
      %v1491 = vmul.f32 %v979, %v1427
      %v1492 = vmul.f32 %v980, %v1428
      %v1493 = vmul.f32 %v981, %v1429
      %v1494 = vmul.f32 %v982, %v1430
      %v1495 = vmul.f32 %v983, %v1431
      %v1496 = vmul.f32 %v984, %v1432
      %v1497 = vmul.f32 %v985, %v1433
      %v1498 = vmul.f32 %v986, %v1434
      %v1499 = vmul.f32 %v987, %v1435
      %v1500 = vmul.f32 %v988, %v1436
      %v1501 = vmul.f32 %v989, %v1437
      %v1502 = vmul.f32 %v990, %v1438
      %v1503 = vmul.f32 %v991, %v1439
      %v1504 = vmul.f32 %v992, %v1440
      %v1505 = vmul.f32 %v993, %v1441
      %v1506 = vmul.f32 %v994, %v1442
      %v1507 = vmul.f32 %v995, %v1443
      %v1508 = vmul.f32 %v996, %v1444
      %v1509 = vmul.f32 %v997, %v1445
      %v1510 = vmul.f32 %v998, %v1446
      %v1511 = vmul.f32 %v999, %v1447
      %v1512 = vmul.f32 %v1000, %v1448
      %v1513 = vmul.f32 %v1001, %v1449
      %v1514 = vmul.f32 %v1002, %v1450
      %v1515 = vmul.f32 %v1003, %v1451
      %v1516 = vmul.f32 %v1004, %v1452
      %v1517 = vmul.f32 %v1005, %v1453
      %v1518 = vmul.f32 %v1006, %v1454
      %v1519 = vmul.f32 %v1007, %v1455
      %v1520 = vmul.f32 %v1008, %v1456
      %v1521 = vmul.f32 %v1009, %v1457
      %v1522 = vmul.f32 %v1010, %v1458
      %v1523 = vmul.f32 %v1011, %v1459
      %v1524 = vmul.f32 %v1012, %v1460
      %v1525 = vmul.f32 %v1013, %v1461
      %v1526 = vmul.f32 %v1014, %v1462
      %v1527 = vmul.f32 %v1015, %v1463
      %v1528 = vmul.f32 %v1016, %v1464
      %v1529 = vmul.f32 %v1017, %v1465
      %v1530 = vmul.f32 %v1018, %v1466
      %v1531 = vmul.f32 %v1019, %v1467
      %v1532 = vmul.f32 %v1020, %v1468
      %v1533 = vmul.f32 %v1021, %v1469
      %v1534 = vmul.f32 %v1022, %v1470
      %v1535 = vmul.f32 %v1023, %v1471
      %v1536 = vmul.f32 %v1024, %v1472
      %v1537 = vmul.f32 %v1025, %v1473
      %v1538 = vmul.f32 %v1026, %v1474
      %v1539 = vmul.f32 %v1027, %v1475
      %v1540 = vmul.f32 %v1028, %v1476
      %v1541 = vmul.f32 %v1029, %v1477
      %v1542 = vmul.f32 %v1030, %v1478
      %v1543 = vld [vmem:[%s2] sm:$0x1]
      %v1545 = vlaneseq
      %v1546 = vshrl.u32 %v1545, 7
      %v1547 = vsub.s32 0, %v1546
      %v1548 = vrot.slane %v1543, %v1547
      %v1550 = vmul.f32 %v1479, %v1548
      %v1551 = vmul.f32 %v1480, %v1548
      %v1552 = vmul.f32 %v1481, %v1548
      %v1553 = vmul.f32 %v1482, %v1548
      %v1554 = vmul.f32 %v1483, %v1548
      %v1555 = vmul.f32 %v1484, %v1548
      %v1556 = vmul.f32 %v1485, %v1548
      %v1557 = vmul.f32 %v1486, %v1548
      %v1558 = vmul.f32 %v1487, %v1548
      %v1559 = vmul.f32 %v1488, %v1548
      %v1560 = vmul.f32 %v1489, %v1548
      %v1561 = vmul.f32 %v1490, %v1548
      %v1562 = vmul.f32 %v1491, %v1548
      %v1563 = vmul.f32 %v1492, %v1548
      %v1564 = vmul.f32 %v1493, %v1548
      %v1565 = vmul.f32 %v1494, %v1548
      %v1566 = vmul.f32 %v1495, %v1548
      %v1567 = vmul.f32 %v1496, %v1548
      %v1568 = vmul.f32 %v1497, %v1548
      %v1569 = vmul.f32 %v1498, %v1548
      %v1570 = vmul.f32 %v1499, %v1548
      %v1571 = vmul.f32 %v1500, %v1548
      %v1572 = vmul.f32 %v1501, %v1548
      %v1573 = vmul.f32 %v1502, %v1548
      %v1574 = vmul.f32 %v1503, %v1548
      %v1575 = vmul.f32 %v1504, %v1548
      %v1576 = vmul.f32 %v1505, %v1548
      %v1577 = vmul.f32 %v1506, %v1548
      %v1578 = vmul.f32 %v1507, %v1548
      %v1579 = vmul.f32 %v1508, %v1548
      %v1580 = vmul.f32 %v1509, %v1548
      %v1581 = vmul.f32 %v1510, %v1548
      %v1582 = vmul.f32 %v1511, %v1548
      %v1583 = vmul.f32 %v1512, %v1548
      %v1584 = vmul.f32 %v1513, %v1548
      %v1585 = vmul.f32 %v1514, %v1548
      %v1586 = vmul.f32 %v1515, %v1548
      %v1587 = vmul.f32 %v1516, %v1548
      %v1588 = vmul.f32 %v1517, %v1548
      %v1589 = vmul.f32 %v1518, %v1548
      %v1590 = vmul.f32 %v1519, %v1548
      %v1591 = vmul.f32 %v1520, %v1548
      %v1592 = vmul.f32 %v1521, %v1548
      %v1593 = vmul.f32 %v1522, %v1548
      %v1594 = vmul.f32 %v1523, %v1548
      %v1595 = vmul.f32 %v1524, %v1548
      %v1596 = vmul.f32 %v1525, %v1548
      %v1597 = vmul.f32 %v1526, %v1548
      %v1598 = vmul.f32 %v1527, %v1548
      %v1599 = vmul.f32 %v1528, %v1548
      %v1600 = vmul.f32 %v1529, %v1548
      %v1601 = vmul.f32 %v1530, %v1548
      %v1602 = vmul.f32 %v1531, %v1548
      %v1603 = vmul.f32 %v1532, %v1548
      %v1604 = vmul.f32 %v1533, %v1548
      %v1605 = vmul.f32 %v1534, %v1548
      %v1606 = vmul.f32 %v1535, %v1548
      %v1607 = vmul.f32 %v1536, %v1548
      %v1608 = vmul.f32 %v1537, %v1548
      %v1609 = vmul.f32 %v1538, %v1548
      %v1610 = vmul.f32 %v1539, %v1548
      %v1611 = vmul.f32 %v1540, %v1548
      %v1612 = vmul.f32 %v1541, %v1548
      %v1613 = vmul.f32 %v1542, %v1548
      %v1614 = vld [vmem:[%s3] sm:$0x1]
      %v1616 = vlaneseq
      %v1617 = vshrl.u32 %v1616, 7
      %v1618 = vsub.s32 0, %v1617
      %v1619 = vrot.slane %v1614, %v1618
      %v1621 = vadd.f32 %v1550, %v1619
      %v1622 = vadd.f32 %v1551, %v1619
      %v1623 = vadd.f32 %v1552, %v1619
      %v1624 = vadd.f32 %v1553, %v1619
      %v1625 = vadd.f32 %v1554, %v1619
      %v1626 = vadd.f32 %v1555, %v1619
      %v1627 = vadd.f32 %v1556, %v1619
      %v1628 = vadd.f32 %v1557, %v1619
      %v1629 = vadd.f32 %v1558, %v1619
      %v1630 = vadd.f32 %v1559, %v1619
      %v1631 = vadd.f32 %v1560, %v1619
      %v1632 = vadd.f32 %v1561, %v1619
      %v1633 = vadd.f32 %v1562, %v1619
      %v1634 = vadd.f32 %v1563, %v1619
      %v1635 = vadd.f32 %v1564, %v1619
      %v1636 = vadd.f32 %v1565, %v1619
      %v1637 = vadd.f32 %v1566, %v1619
      %v1638 = vadd.f32 %v1567, %v1619
      %v1639 = vadd.f32 %v1568, %v1619
      %v1640 = vadd.f32 %v1569, %v1619
      %v1641 = vadd.f32 %v1570, %v1619
      %v1642 = vadd.f32 %v1571, %v1619
      %v1643 = vadd.f32 %v1572, %v1619
      %v1644 = vadd.f32 %v1573, %v1619
      %v1645 = vadd.f32 %v1574, %v1619
      %v1646 = vadd.f32 %v1575, %v1619
      %v1647 = vadd.f32 %v1576, %v1619
      %v1648 = vadd.f32 %v1577, %v1619
      %v1649 = vadd.f32 %v1578, %v1619
      %v1650 = vadd.f32 %v1579, %v1619
      %v1651 = vadd.f32 %v1580, %v1619
      %v1652 = vadd.f32 %v1581, %v1619
      %v1653 = vadd.f32 %v1582, %v1619
      %v1654 = vadd.f32 %v1583, %v1619
      %v1655 = vadd.f32 %v1584, %v1619
      %v1656 = vadd.f32 %v1585, %v1619
      %v1657 = vadd.f32 %v1586, %v1619
      %v1658 = vadd.f32 %v1587, %v1619
      %v1659 = vadd.f32 %v1588, %v1619
      %v1660 = vadd.f32 %v1589, %v1619
      %v1661 = vadd.f32 %v1590, %v1619
      %v1662 = vadd.f32 %v1591, %v1619
      %v1663 = vadd.f32 %v1592, %v1619
      %v1664 = vadd.f32 %v1593, %v1619
      %v1665 = vadd.f32 %v1594, %v1619
      %v1666 = vadd.f32 %v1595, %v1619
      %v1667 = vadd.f32 %v1596, %v1619
      %v1668 = vadd.f32 %v1597, %v1619
      %v1669 = vadd.f32 %v1598, %v1619
      %v1670 = vadd.f32 %v1599, %v1619
      %v1671 = vadd.f32 %v1600, %v1619
      %v1672 = vadd.f32 %v1601, %v1619
      %v1673 = vadd.f32 %v1602, %v1619
      %v1674 = vadd.f32 %v1603, %v1619
      %v1675 = vadd.f32 %v1604, %v1619
      %v1676 = vadd.f32 %v1605, %v1619
      %v1677 = vadd.f32 %v1606, %v1619
      %v1678 = vadd.f32 %v1607, %v1619
      %v1679 = vadd.f32 %v1608, %v1619
      %v1680 = vadd.f32 %v1609, %v1619
      %v1681 = vadd.f32 %v1610, %v1619
      %v1682 = vadd.f32 %v1611, %v1619
      %v1683 = vadd.f32 %v1612, %v1619
      %v1684 = vadd.f32 %v1613, %v1619
      %1685 = vst.msk [vmem:[%s199] sm:$0xff] %vm709, %v1621
      %1686 = vst.msk [vmem:[%s199 + $0x8] sm:$0xff] %vm709, %v1622
      %1687 = vst.msk [vmem:[%s199 + $0x10] sm:$0xff] %vm709, %v1623
      %1688 = vst.msk [vmem:[%s199 + $0x18] sm:$0xff] %vm709, %v1624
      %1689 = vst.msk [vmem:[%s199 + $0x20] sm:$0xff] %vm709, %v1625
      %1690 = vst.msk [vmem:[%s199 + $0x28] sm:$0xff] %vm709, %v1626
      %1691 = vst.msk [vmem:[%s199 + $0x30] sm:$0xff] %vm709, %v1627
      %1692 = vst.msk [vmem:[%s199 + $0x38] sm:$0xff] %vm709, %v1628
      %1693 = vst.msk [vmem:[%s199 + $0x40] sm:$0xff] %vm709, %v1629
      %1694 = vst.msk [vmem:[%s199 + $0x48] sm:$0xff] %vm709, %v1630
      %1695 = vst.msk [vmem:[%s199 + $0x50] sm:$0xff] %vm709, %v1631
      %1696 = vst.msk [vmem:[%s199 + $0x58] sm:$0xff] %vm709, %v1632
      %1697 = vst.msk [vmem:[%s199 + $0x60] sm:$0xff] %vm709, %v1633
      %1698 = vst.msk [vmem:[%s199 + $0x68] sm:$0xff] %vm709, %v1634
      %1699 = vst.msk [vmem:[%s199 + $0x70] sm:$0xff] %vm709, %v1635
      %1700 = vst.msk [vmem:[%s199 + $0x78] sm:$0xff] %vm709, %v1636
      %1701 = vst.msk [vmem:[%s199 + $0x80] sm:$0xff] %vm709, %v1637
      %1702 = vst.msk [vmem:[%s199 + $0x88] sm:$0xff] %vm709, %v1638
      %1703 = vst.msk [vmem:[%s199 + $0x90] sm:$0xff] %vm709, %v1639
      %1704 = vst.msk [vmem:[%s199 + $0x98] sm:$0xff] %vm709, %v1640
      %1705 = vst.msk [vmem:[%s199 + $0xa0] sm:$0xff] %vm709, %v1641
      %1706 = vst.msk [vmem:[%s199 + $0xa8] sm:$0xff] %vm709, %v1642
      %1707 = vst.msk [vmem:[%s199 + $0xb0] sm:$0xff] %vm709, %v1643
      %1708 = vst.msk [vmem:[%s199 + $0xb8] sm:$0xff] %vm709, %v1644
      %1709 = vst.msk [vmem:[%s199 + $0xc0] sm:$0xff] %vm709, %v1645
      %1710 = vst.msk [vmem:[%s199 + $0xc8] sm:$0xff] %vm709, %v1646
      %1711 = vst.msk [vmem:[%s199 + $0xd0] sm:$0xff] %vm709, %v1647
      %1712 = vst.msk [vmem:[%s199 + $0xd8] sm:$0xff] %vm709, %v1648
      %1713 = vst.msk [vmem:[%s199 + $0xe0] sm:$0xff] %vm709, %v1649
      %1714 = vst.msk [vmem:[%s199 + $0xe8] sm:$0xff] %vm709, %v1650
      %1715 = vst.msk [vmem:[%s199 + $0xf0] sm:$0xff] %vm709, %v1651
      %1716 = vst.msk [vmem:[%s199 + $0xf8] sm:$0xff] %vm709, %v1652
      %1717 = vst.msk [vmem:[%s199 + $0x100] sm:$0xff] %vm709, %v1653
      %1718 = vst.msk [vmem:[%s199 + $0x108] sm:$0xff] %vm709, %v1654
      %1719 = vst.msk [vmem:[%s199 + $0x110] sm:$0xff] %vm709, %v1655
      %1720 = vst.msk [vmem:[%s199 + $0x118] sm:$0xff] %vm709, %v1656
      %1721 = vst.msk [vmem:[%s199 + $0x120] sm:$0xff] %vm709, %v1657
      %1722 = vst.msk [vmem:[%s199 + $0x128] sm:$0xff] %vm709, %v1658
      %1723 = vst.msk [vmem:[%s199 + $0x130] sm:$0xff] %vm709, %v1659
      %1724 = vst.msk [vmem:[%s199 + $0x138] sm:$0xff] %vm709, %v1660
      %1725 = vst.msk [vmem:[%s199 + $0x140] sm:$0xff] %vm709, %v1661
      %1726 = vst.msk [vmem:[%s199 + $0x148] sm:$0xff] %vm709, %v1662
      %1727 = vst.msk [vmem:[%s199 + $0x150] sm:$0xff] %vm709, %v1663
      %1728 = vst.msk [vmem:[%s199 + $0x158] sm:$0xff] %vm709, %v1664
      %1729 = vst.msk [vmem:[%s199 + $0x160] sm:$0xff] %vm709, %v1665
      %1730 = vst.msk [vmem:[%s199 + $0x168] sm:$0xff] %vm709, %v1666
      %1731 = vst.msk [vmem:[%s199 + $0x170] sm:$0xff] %vm709, %v1667
      %1732 = vst.msk [vmem:[%s199 + $0x178] sm:$0xff] %vm709, %v1668
      %1733 = vst.msk [vmem:[%s199 + $0x180] sm:$0xff] %vm709, %v1669
      %1734 = vst.msk [vmem:[%s199 + $0x188] sm:$0xff] %vm709, %v1670
      %1735 = vst.msk [vmem:[%s199 + $0x190] sm:$0xff] %vm709, %v1671
      %1736 = vst.msk [vmem:[%s199 + $0x198] sm:$0xff] %vm709, %v1672
      %1737 = vst.msk [vmem:[%s199 + $0x1a0] sm:$0xff] %vm709, %v1673
      %1738 = vst.msk [vmem:[%s199 + $0x1a8] sm:$0xff] %vm709, %v1674
      %1739 = vst.msk [vmem:[%s199 + $0x1b0] sm:$0xff] %vm709, %v1675
      %1740 = vst.msk [vmem:[%s199 + $0x1b8] sm:$0xff] %vm709, %v1676
      %1741 = vst.msk [vmem:[%s199 + $0x1c0] sm:$0xff] %vm709, %v1677
      %1742 = vst.msk [vmem:[%s199 + $0x1c8] sm:$0xff] %vm709, %v1678
      %1743 = vst.msk [vmem:[%s199 + $0x1d0] sm:$0xff] %vm709, %v1679
      %1744 = vst.msk [vmem:[%s199 + $0x1d8] sm:$0xff] %vm709, %v1680
      %1745 = vst.msk [vmem:[%s199 + $0x1e0] sm:$0xff] %vm709, %v1681
      %1746 = vst.msk [vmem:[%s199 + $0x1e8] sm:$0xff] %vm709, %v1682
      %1747 = vst.msk [vmem:[%s199 + $0x1f0] sm:$0xff] %vm709, %v1683
      %1748 = vst.msk [vmem:[%s199 + $0x1f8] sm:$0xff] %vm709, %v1684
      %s1749 = smul.u32 64, %s15
      %p1750 = scmp.lt.s32.totalorder %s1749, 127
      %s1751 = scalar_select %p1750, %s1749, 127
      %s1752 = smul.addr %s1751, 8
      %s1753 = scalar_lea.vmem %s4, %s1752
      // Predicated region
      $region37: #{tpu_custom_call.1} parent=35 // pred_check
        %p1754 = pneg %p122
      $region38: #{tpu_custom_call.1} parent=35 // pred_check_branch
        %1756 = sbr.rel (%p1754) target = $region40
      $region39: #{tpu_custom_call.1} parent=35 // pred_region
        %s1757 = smul.u32 64, %s15
      $region40: #{tpu_custom_call.1} parent=35 // pred_fallthru
        _
    $region36: #{tpu_custom_call.1} parent=5 // pred_fallthru
      _
    %p1758 = scmp.le.s32.totalorder 2, %s10
    // Predicated region
    $region41: #{tpu_custom_call.1} parent=5 // pred_check
      %p1759 = pneg %p1758
    $region42: #{tpu_custom_call.1} parent=5 // pred_check_branch
      %1761 = sbr.rel (%p1759) target = $region44
    $region43: #{tpu_custom_call.1} parent=5 // pred_region
      %s1762 = ssub.s32 %s10, 2
      // Predicated region
      $region45: #{tpu_custom_call.1} parent=43 // pred_check
        %p1763 = pneg %p128
      $region46: #{tpu_custom_call.1} parent=43 // pred_check_branch
        %1765 = sbr.rel (%p1763) target = $region48
      $region47: #{tpu_custom_call.1} parent=43 // pred_region
        %s1766 = smul.u32 64, %s16
        %p1767 = scmp.lt.s32.totalorder %s1766, 127
        %s1768 = scalar_select %p1767, %s1766, 127
        %s1769 = smul.addr %s1768, 8
        %s1770 = scalar_lea.vmem %s4, %s1769
      $region48: #{tpu_custom_call.1} parent=43 // pred_fallthru
        _
    $region44: #{tpu_custom_call.1} parent=5 // pred_fallthru
      _
  $region6: #{tpu_custom_call.1} parent=0 // loop_footer
    %s14 = sadd.s32 1, %s10
  $region7: #{tpu_custom_call.1} parent=0 // loop_footer_branch
    %9 = sbr.rel target = $region3
  $region8: #{tpu_custom_call.1} parent=0 // loop_exit
    _

</llo_original>
